<compile_context>
chip_gen: v7x
topology: tpu7x:2x2x1
jax: 0.10.0
libtpu: 0.0.40
codegen_flags: <defaults>
</compile_context>

<pallas_src>
import math

import jax
import jax.numpy as jnp
import numpy as np
from jax.experimental import pallas as pl
from jax.experimental.pallas import tpu as pltpu


# ----------------------------------------------------------------------------
# Diffusion schedule (host glue, plain JAX).  PyTorch uses float64; TPU default
# is float32 — differences are at the ~1e-7 level for these sizes.
# ----------------------------------------------------------------------------
def sigmoid_beta_schedule(timesteps, start=-3.0, end=3.0, tau=1.0):
    steps = timesteps + 1
    t = jnp.linspace(0.0, timesteps, steps, dtype=jnp.float32) / timesteps
    v_start = jax.nn.sigmoid(jnp.float32(start / tau))
    v_end = jax.nn.sigmoid(jnp.float32(end / tau))
    alphas_cumprod = (-jax.nn.sigmoid((t * (end - start) + start) / tau) + v_end) / (
        v_end - v_start
    )
    alphas_cumprod = alphas_cumprod / alphas_cumprod[0]
    betas = 1.0 - alphas_cumprod[1:] / alphas_cumprod[:-1]
    return jnp.clip(betas, 0.0, 0.999)


def sinusoidal_time_embedding(t, dim):
    half = dim // 2
    emb = math.log(10000.0) / (half - 1)
    freqs = jnp.exp(jnp.arange(half, dtype=jnp.float32) * -emb)
    args = t.astype(jnp.float32)[:, None] * freqs[None, :]
    return jnp.concatenate([jnp.sin(args), jnp.cos(args)], axis=-1)  # (B, dim)


# ----------------------------------------------------------------------------
# Pallas kernel: full p_losses hot path in one VMEM-resident block.
#
#   x0, noise : (B, L)   f32
#   temb      : (B, 32)  bf16   sinusoidal time embedding (no zero padding)
#   sc        : (B, 8)   f32    packed per-sample scalars:
#                               col 0 = sqrt(acp[t]), col 1 = sqrt(1 - acp[t]),
#                               col 2 = p2_loss_weight[t], cols 3..7 = 0
#   w1        : (L, H)   bf16
#   wt        : (32, H)  bf16
#   b1        : (1, H)   f32
#   w2        : (H, L)   bf16
#   b2        : (1, L)   f32
#   loss      : (1, 1)   f32    SMEM scalar output
# ----------------------------------------------------------------------------
def wave_ddpm_loss_kernel(
    x0_ref, noise_ref, temb_ref, sc_ref,
    w1_ref, wt_ref, b1_ref, w2_ref, b2_ref,
    loss_ref,
):
    sa = sc_ref[:, 0:1]      # (B, 1) sqrt(alphas_cumprod[t])
    soma = sc_ref[:, 1:2]    # (B, 1) sqrt(1 - alphas_cumprod[t])
    p2w = sc_ref[:, 2:3]     # (B, 1) p2_loss_weight[t]

    # q_sample: x_t = sqrt(acp[t]) * x0 + sqrt(1 - acp[t]) * noise   (f32)
    x_t = sa * x0_ref[...] + soma * noise_ref[...]

    # Layer 1: two accumulating MXU dots into one f32 accumulator
    # (replaces the concat + K=384 dot; total K-cycles are identical,
    #  no (B, L+128) bf16 temporary is materialized).
    h = jnp.dot(x_t.astype(jnp.bfloat16), w1_ref[...],
                preferred_element_type=jnp.float32)
    h = h + jnp.dot(temb_ref[...], wt_ref[...],
                    preferred_element_type=jnp.float32)
    h = jnp.maximum(h + b1_ref[...], 0.0)

    # Layer 2.
    model_out = (
        jnp.dot(h.astype(jnp.bfloat16), w2_ref[...],
                preferred_element_type=jnp.float32)
        + b2_ref[...]
    )                                                      # (B, L) f32

    # objective == 'pred_x0' -> target = x_start ; loss_type == 'l1'.
    # Re-read x0 from VMEM here (rather than reusing the binding captured
    # before the matmuls) to keep its vregs free during the MXU phase.
    # p2w applied AFTER the per-row lane reduction — identical to weighting
    # every element since the weight is constant over the length.
    per_row = jnp.sum(jnp.abs(model_out - x0_ref[...]), axis=-1,
                      keepdims=True)                        # (B, 1)
    b, l = x0_ref.shape
    loss_ref[0, 0] = jnp.sum(per_row * p2w) / (b * l)


def wave_ddpm_loss(x0, noise, temb, sc, w1, wt, b1, w2, b2):
    args = (x0, noise, temb, sc, w1, wt, b1, w2, b2)
    B, L = x0.shape
    _, H = w1.shape
    DT = temb.shape[1]

    # Advisory cost hint for XLA's scheduler around the custom call.
    flops = 2 * B * (L * H + DT * H + H * L) + 8 * B * L
    nbytes = lambda a: math.prod(a.shape) * jnp.dtype(a.dtype).itemsize
    bytes_accessed = sum(nbytes(a) for a in args) + 4

    vmem = pl.BlockSpec(memory_space=pltpu.MemorySpace.VMEM)
    smem = pl.BlockSpec(memory_space=pltpu.MemorySpace.SMEM)
    out = pl.pallas_call(
        wave_ddpm_loss_kernel,
        out_shape=jax.ShapeDtypeStruct((1, 1), jnp.float32),
        in_specs=[vmem] * len(args),
        out_specs=smem,
        cost_estimate=pl.CostEstimate(
            flops=flops, transcendentals=0, bytes_accessed=bytes_accessed),
    )(*args)
    # Single block, no grid: total footprint < 1 MiB of VMEM, so per-step grid
    # overhead would only hurt on 1-TC chips.  When scaling L (real audio
    # lengths), grid over batch rows with weights held resident (constant
    # index_map) so double-buffering hides the x0/noise/temb DMA; size tiles
    # against v7x's 64 MiB physical / 32 MiB default scoped VMEM (raise
    # vmem_limit_bytes via pltpu.CompilerParams) with lane-dim tiles >= 512.
    return out[0, 0]


# ----------------------------------------------------------------------------
# Pure-JAX reference mirroring the kernel's numerics (bf16 MXU operands).
# ----------------------------------------------------------------------------
def wave_ddpm_loss_ref(x0, noise, temb, sc, w1, wt, b1, w2, b2):
    sa, soma, p2w = sc[:, 0:1], sc[:, 1:2], sc[:, 2:3]
    x_t = sa * x0 + soma * noise
    h = jnp.dot(x_t.astype(jnp.bfloat16), w1, preferred_element_type=jnp.float32)
    h = h + jnp.dot(temb, wt, preferred_element_type=jnp.float32)
    h = jnp.maximum(h + b1, 0.0)
    model_out = (
        jnp.dot(h.astype(jnp.bfloat16), w2, preferred_element_type=jnp.float32) + b2
    )
    per_row = jnp.mean(jnp.abs(model_out - x0), axis=-1, keepdims=True)
    return jnp.mean(per_row * p2w)


if __name__ == "__main__":
    # Shapes consistent with WaveDDPM.forward: audio is (B, signal_len).
    # B sized to 256 so the MXU's systolic rows are filled; total VMEM
    # footprint is still well under 1 MiB.
    B = 256            # batch (effective M for the matmuls)
    L = 256            # signal_len
    H = 128            # denoiser hidden width
    DT = 32            # time-embedding dim
    TIMESTEPS = 1000

    key = jax.random.PRNGKey(0)
    k_audio, k_t, k_noise, k_w1, k_wt, k_w2 = jax.random.split(key, 6)

    # ----- diffusion buffers (as in WaveDDPM.__init__) -----
    betas = sigmoid_beta_schedule(TIMESTEPS)
    alphas = 1.0 - betas
    alphas_cumprod = jnp.cumprod(alphas)
    sqrt_alphas_cumprod = jnp.sqrt(alphas_cumprod)
    sqrt_one_minus_alphas_cumprod = jnp.sqrt(1.0 - alphas_cumprod)
    # p2_loss_weight_gamma = 0, k = 1  ->  identically 1.0 (kept for fidelity)
    p2_loss_weight = (1.0 + alphas_cumprod / (1.0 - alphas_cumprod)) ** (-0.0)

    # ----- forward inputs -----
    audio = jax.random.normal(k_audio, (B, L), dtype=jnp.float32)
    t = jax.random.randint(k_t, (B,), 0, TIMESTEPS)
    noise = jax.random.normal(k_noise, (B, L), dtype=jnp.float32)

    # extract(buf, t, x.shape): per-batch scalars, packed into one (B, 8) f32
    # array (cols 0/1/2 = sa / soma / p2w) -> single DMA + single load.
    sa = sqrt_alphas_cumprod[t][:, None]                 # (B, 1)
    soma = sqrt_one_minus_alphas_cumprod[t][:, None]     # (B, 1)
    p2w = p2_loss_weight[t][:, None]                     # (B, 1)
    sc = jnp.concatenate(
        [sa, soma, p2w, jnp.zeros((B, 5), jnp.float32)], axis=-1)  # (B, 8)

    temb = sinusoidal_time_embedding(t, DT).astype(jnp.bfloat16)   # (B, 32)

    # ----- deterministic synthetic denoiser params (bf16 for MXU inputs) -----
    w1 = (jax.random.normal(k_w1, (L, H), dtype=jnp.float32)
          * (1.0 / math.sqrt(L))).astype(jnp.bfloat16)
    wt = (jax.random.normal(k_wt, (DT, H), dtype=jnp.float32)
          * (1.0 / math.sqrt(DT))).astype(jnp.bfloat16)
    w2 = (jax.random.normal(k_w2, (H, L), dtype=jnp.float32)
          * (1.0 / math.sqrt(H))).astype(jnp.bfloat16)
    b1 = jnp.zeros((1, H), dtype=jnp.float32)
    b2 = jnp.zeros((1, L), dtype=jnp.float32)

    # ----- run kernel -----
    loss = wave_ddpm_loss(audio, noise, temb, sc, w1, wt, b1, w2, b2)
    loss = jax.block_until_ready(loss)

    loss_ref = wave_ddpm_loss_ref(audio, noise, temb, sc, w1, wt, b1, w2, b2)
    np.testing.assert_allclose(
        np.asarray(loss), np.asarray(loss_ref), rtol=1e-4, atol=1e-5)

    print("KERNEL_OK")
</pallas_src>

<mosaic_0001>
module attributes {stable_mosaic.version = 11 : i64} {
  func.func @wave_ddpm_loss_kernel(%arg0: memref<256x256xf32, #tpu.memory_space<vmem>>, %arg1: memref<256x256xf32, #tpu.memory_space<vmem>>, %arg2: memref<256x32xbf16, #tpu.memory_space<vmem>>, %arg3: memref<256x8xf32, #tpu.memory_space<vmem>>, %arg4: memref<256x128xbf16, #tpu.memory_space<vmem>>, %arg5: memref<32x128xbf16, #tpu.memory_space<vmem>>, %arg6: memref<1x128xf32, #tpu.memory_space<vmem>>, %arg7: memref<128x256xbf16, #tpu.memory_space<vmem>>, %arg8: memref<1x256xf32, #tpu.memory_space<vmem>>, %arg9: memref<1x1xf32, #tpu.memory_space<smem>>) attributes {dimension_semantics = [], scalar_prefetch = 0 : i64, scratch_operands = 0 : i64, tpu.core_type = #tpu.core_type<tc>} {
    %c0 = arith.constant 0 : index
    %c0_0 = arith.constant 0 : index
    %0 = vector.load %arg3[%c0, %c0_0] : memref<256x8xf32, #tpu.memory_space<vmem>>, vector<256x1xf32>
    %c0_1 = arith.constant 0 : index
    %c1 = arith.constant 1 : index
    %1 = vector.load %arg3[%c0_1, %c1] : memref<256x8xf32, #tpu.memory_space<vmem>>, vector<256x1xf32>
    %c0_2 = arith.constant 0 : index
    %c2 = arith.constant 2 : index
    %2 = vector.load %arg3[%c0_2, %c2] : memref<256x8xf32, #tpu.memory_space<vmem>>, vector<256x1xf32>
    %c0_3 = arith.constant 0 : index
    %c0_4 = arith.constant 0 : index
    %3 = vector.load %arg0[%c0_3, %c0_4] : memref<256x256xf32, #tpu.memory_space<vmem>>, vector<256x256xf32>
    %4 = vector.broadcast %0 : vector<256x1xf32> to vector<256x256xf32>
    %5 = arith.mulf %4, %3 : vector<256x256xf32>
    %c0_5 = arith.constant 0 : index
    %c0_6 = arith.constant 0 : index
    %6 = vector.load %arg1[%c0_5, %c0_6] : memref<256x256xf32, #tpu.memory_space<vmem>>, vector<256x256xf32>
    %7 = vector.broadcast %1 : vector<256x1xf32> to vector<256x256xf32>
    %8 = arith.mulf %7, %6 : vector<256x256xf32>
    %9 = arith.addf %5, %8 : vector<256x256xf32>
    %10 = arith.truncf %9 : vector<256x256xf32> to vector<256x256xbf16>
    %c0_7 = arith.constant 0 : index
    %c0_8 = arith.constant 0 : index
    %11 = vector.load %arg4[%c0_7, %c0_8] : memref<256x128xbf16, #tpu.memory_space<vmem>>, vector<256x128xbf16>
    %cst = arith.constant dense<0.000000e+00> : vector<256x128xf32>
    %12 = tpu.matmul %10, %11, %cst {dimension_numbers = #tpu.dot_dimension_numbers<[1], [0], [0], [1], [0, 0, 1, 1], [], []>} : vector<256x256xbf16>, vector<256x128xbf16>, vector<256x128xf32> -> vector<256x128xf32>
    %c0_9 = arith.constant 0 : index
    %c0_10 = arith.constant 0 : index
    %13 = vector.load %arg2[%c0_9, %c0_10] : memref<256x32xbf16, #tpu.memory_space<vmem>>, vector<256x32xbf16>
    %c0_11 = arith.constant 0 : index
    %c0_12 = arith.constant 0 : index
    %14 = vector.load %arg5[%c0_11, %c0_12] : memref<32x128xbf16, #tpu.memory_space<vmem>>, vector<32x128xbf16>
    %cst_13 = arith.constant dense<0.000000e+00> : vector<256x128xf32>
    %15 = tpu.matmul %13, %14, %cst_13 {dimension_numbers = #tpu.dot_dimension_numbers<[1], [0], [0], [1], [0, 0, 1, 1], [], []>} : vector<256x32xbf16>, vector<32x128xbf16>, vector<256x128xf32> -> vector<256x128xf32>
    %16 = arith.addf %12, %15 : vector<256x128xf32>
    %c0_14 = arith.constant 0 : index
    %c0_15 = arith.constant 0 : index
    %17 = vector.load %arg6[%c0_14, %c0_15] : memref<1x128xf32, #tpu.memory_space<vmem>>, vector<1x128xf32>
    %18 = vector.broadcast %17 : vector<1x128xf32> to vector<256x128xf32>
    %19 = arith.addf %16, %18 : vector<256x128xf32>
    %cst_16 = arith.constant 0.000000e+00 : f32
    %20 = vector.broadcast %cst_16 : f32 to vector<256x128xf32>
    %21 = arith.maximumf %19, %20 : vector<256x128xf32>
    %22 = arith.truncf %21 : vector<256x128xf32> to vector<256x128xbf16>
    %c0_17 = arith.constant 0 : index
    %c0_18 = arith.constant 0 : index
    %23 = vector.load %arg7[%c0_17, %c0_18] : memref<128x256xbf16, #tpu.memory_space<vmem>>, vector<128x256xbf16>
    %cst_19 = arith.constant dense<0.000000e+00> : vector<256x256xf32>
    %24 = tpu.matmul %22, %23, %cst_19 {dimension_numbers = #tpu.dot_dimension_numbers<[1], [0], [0], [1], [0, 0, 1, 1], [], []>} : vector<256x128xbf16>, vector<128x256xbf16>, vector<256x256xf32> -> vector<256x256xf32>
    %c0_20 = arith.constant 0 : index
    %c0_21 = arith.constant 0 : index
    %25 = vector.load %arg8[%c0_20, %c0_21] : memref<1x256xf32, #tpu.memory_space<vmem>>, vector<1x256xf32>
    %26 = vector.broadcast %25 : vector<1x256xf32> to vector<256x256xf32>
    %27 = arith.addf %24, %26 : vector<256x256xf32>
    %c0_22 = arith.constant 0 : index
    %c0_23 = arith.constant 0 : index
    %28 = vector.load %arg0[%c0_22, %c0_23] : memref<256x256xf32, #tpu.memory_space<vmem>>, vector<256x256xf32>
    %29 = arith.subf %27, %28 : vector<256x256xf32>
    %30 = math.absf %29 : vector<256x256xf32>
    %cst_24 = arith.constant dense<0.000000e+00> : vector<256xf32>
    %31 = vector.multi_reduction <add>, %30, %cst_24 [1] : vector<256x256xf32> to vector<256xf32>
    %32 = vector.shape_cast %31 : vector<256xf32> to vector<256x1xf32>
    %33 = arith.mulf %32, %2 : vector<256x1xf32>
    %34 = vector.shape_cast %33 : vector<256x1xf32> to vector<1x256x1xf32>
    %cst_25 = arith.constant dense<0.000000e+00> : vector<1xf32>
    %35 = vector.multi_reduction <add>, %34, %cst_25 [1, 2] : vector<1x256x1xf32> to vector<1xf32>
    %36 = vector.shape_cast %35 : vector<1xf32> to vector<1x1x1xf32>
    %37 = vector.extract %36[0, 0, 0] : f32 from vector<1x1x1xf32>
    %cst_26 = arith.constant 6.553600e+04 : f32
    %38 = arith.divf %37, %cst_26 : f32
    %c0_27 = arith.constant 0 : index
    %c0_28 = arith.constant 0 : index
    %39 = memref.load %arg9[%c0_27, %c0_28] : memref<1x1xf32, #tpu.memory_space<smem>>
    memref.store %38, %arg9[%c0_27, %c0_28] : memref<1x1xf32, #tpu.memory_space<smem>>
    return
  }
}

</mosaic_0001>

<llo_original>
// kernel: tpu_custom_call.1
$region0: #{tpu_custom_call.1}
  #allocation0 [shape = 'u32[]', space=smem, size = 0x4, offset = 0x4, fixed_abs, tag = 'smem constant byte address 0x4 - core index']
  #allocation1 [shape = 'u32[144,128]{1,0:T(1,128)}', space=vmem, size = 0x12000, scoped, tag = 'internal scratch']
  %s0 = inlined_call_operand.hbm [shape: f32[256,256], index: 0, kind: input, shape index: {}]
  %s1 = inlined_call_operand.hbm [shape: f32[256,256], index: 1, kind: input, shape index: {}]
  %s2 = inlined_call_operand.vmem [shape: bf16[256,32], index: 2, kind: input, shape index: {}]
  %s3 = inlined_call_operand.vmem [shape: f32[256,8], index: 3, kind: input, shape index: {}]
  %s4 = inlined_call_operand.vmem [shape: bf16[256,128], index: 4, kind: input, shape index: {}]
  %s5 = inlined_call_operand.vmem [shape: bf16[32,128], index: 5, kind: input, shape index: {}]
  %s6 = inlined_call_operand.vmem [shape: f32[1,128], index: 6, kind: input, shape index: {}]
  %s7 = inlined_call_operand.vmem [shape: bf16[128,256], index: 7, kind: input, shape index: {}]
  %s8 = inlined_call_operand.vmem [shape: f32[1,256], index: 8, kind: input, shape index: {}]
  %s9 = inlined_call_operand.hbm [shape: f32[1,1], index: 9, kind: output, shape index: {}]
  %s10 = sld [smem:[#allocation0]]
  $region54: #{tpu_custom_call.1} parent=0
    _
  %s12 = ssub.s32 1, %s10
  %s13 = scalar_select 0, %s12, %s10
  $region1: #{tpu_custom_call.1} parent=0
    #allocation2 [shape = 'u8[262144]{0}', space=vmem, size = 0x40000, scoped, tag = 'input window, operand 0, single buffered']
    #allocation3 [shape = 's32[1]{0}', space=sflag, size = 0x4, scoped, tag = 'scoped memory for tpu_custom_call.1']
    #allocation4 [shape = 's32[1]{0}', space=sflag, size = 0x4, scoped, tag = 'scoped memory for tpu_custom_call.1']
    #allocation5 [shape = 'u8[262144]{0}', space=vmem, size = 0x40000, scoped, tag = 'input window, operand 1, single buffered']
    #allocation6 [shape = 's32[1]{0}', space=sflag, size = 0x4, scoped, tag = 'scoped memory for tpu_custom_call.1']
    #allocation7 [shape = 'u8[512]{0}', space=smem, size = 0x200, scoped, tag = 'output window, operand 0, single buffered']
    %14 = vsyncpa [#allocation3], 0
    %15 = vsyncpa [#allocation6], 0
    %16 = vsyncpa [#allocation4], 0
    // Predicated region
    $region2: #{tpu_custom_call.1} parent=1 // pred_check
      _
    $region3: #{tpu_custom_call.1} parent=1 // pred_check_branch
      %18 = sbr.rel (0) target = $region5
    $region4: #{tpu_custom_call.1} parent=1 // pred_region
      %s20 = ssub.s32 8192, 8192
      %21 = vsyncadd [#allocation3], %s20
      %s22 = sshll.u32 [#allocation2], 4
      %s23 = int_to_ptr.vmem [resolvable:$true] %s22
      %28 = dma.hbm_to_vmem [thread:$0]  %s0, 8192, %s23, [#allocation3], 256, 256, 16
    $region5: #{tpu_custom_call.1} parent=1 // pred_fallthru
      _
    // Predicated region
    $region6: #{tpu_custom_call.1} parent=1 // pred_check
      _
    $region7: #{tpu_custom_call.1} parent=1 // pred_check_branch
      %30 = sbr.rel (0) target = $region9
    $region8: #{tpu_custom_call.1} parent=1 // pred_region
      %s32 = ssub.s32 8192, 8192
      %33 = vsyncadd [#allocation6], %s32
      %s34 = sshll.u32 [#allocation5], 4
      %s35 = int_to_ptr.vmem [resolvable:$true] %s34
      %40 = dma.hbm_to_vmem [thread:$0]  %s1, 8192, %s35, [#allocation6], 256, 256, 16
    $region9: #{tpu_custom_call.1} parent=1 // pred_fallthru
      _
    // Predicated region
    $region10: #{tpu_custom_call.1} parent=1 // pred_check
      _
    $region11: #{tpu_custom_call.1} parent=1 // pred_check_branch
      %42 = sbr.rel (0) target = $region13
    $region12: #{tpu_custom_call.1} parent=1 // pred_region
      _
    $region13: #{tpu_custom_call.1} parent=1 // pred_fallthru
      _
    // Predicated region
    $region14: #{tpu_custom_call.1} parent=1 // pred_check
      _
    $region15: #{tpu_custom_call.1} parent=1 // pred_check_branch
      %44 = sbr.rel (0) target = $region17
    $region16: #{tpu_custom_call.1} parent=1 // pred_region
      _
    $region17: #{tpu_custom_call.1} parent=1 // pred_fallthru
      _
    // Predicated region
    $region18: #{tpu_custom_call.1} parent=1 // pred_check
      _
    $region19: #{tpu_custom_call.1} parent=1 // pred_check_branch
      %46 = sbr.rel (0) target = $region21
    $region20: #{tpu_custom_call.1} parent=1 // pred_region
      _
    $region21: #{tpu_custom_call.1} parent=1 // pred_fallthru
      _
    // Predicated region
    $region22: #{tpu_custom_call.1} parent=1 // pred_check
      _
    $region23: #{tpu_custom_call.1} parent=1 // pred_check_branch
      %48 = sbr.rel (0) target = $region25
    $region24: #{tpu_custom_call.1} parent=1 // pred_region
      _
    $region25: #{tpu_custom_call.1} parent=1 // pred_fallthru
      _
    // Predicated region
    $region26: #{tpu_custom_call.1} parent=1 // pred_check
      _
    $region27: #{tpu_custom_call.1} parent=1 // pred_check_branch
      %50 = sbr.rel (0) target = $region29
    $region28: #{tpu_custom_call.1} parent=1 // pred_region
      _
    $region29: #{tpu_custom_call.1} parent=1 // pred_fallthru
      _
    // Predicated region
    $region30: #{tpu_custom_call.1} parent=1 // pred_check
      _
    $region31: #{tpu_custom_call.1} parent=1 // pred_check_branch
      %52 = sbr.rel (0) target = $region33
    $region32: #{tpu_custom_call.1} parent=1 // pred_region
      _
    $region33: #{tpu_custom_call.1} parent=1 // pred_fallthru
      _
    // Predicated region
    $region34: #{tpu_custom_call.1} parent=1 // pred_check
      _
    $region35: #{tpu_custom_call.1} parent=1 // pred_check_branch
      %54 = sbr.rel (0) target = $region37
    $region36: #{tpu_custom_call.1} parent=1 // pred_region
      _
    $region37: #{tpu_custom_call.1} parent=1 // pred_fallthru
      _
    // Predicated region
    $region38: #{tpu_custom_call.1} parent=1 // pred_check
      _
    $region39: #{tpu_custom_call.1} parent=1 // pred_check_branch
      %56 = sbr.rel (0) target = $region41
    $region40: #{tpu_custom_call.1} parent=1 // pred_region
      %57 = dma.done [#allocation3], 8192
    $region41: #{tpu_custom_call.1} parent=1 // pred_fallthru
      _
    // Predicated region
    $region42: #{tpu_custom_call.1} parent=1 // pred_check
      _
    $region43: #{tpu_custom_call.1} parent=1 // pred_check_branch
      %59 = sbr.rel (0) target = $region45
    $region44: #{tpu_custom_call.1} parent=1 // pred_region
      %60 = dma.done [#allocation6], 8192
    $region45: #{tpu_custom_call.1} parent=1 // pred_fallthru
      _
    %v62 = vld [vmem:[%s3] sm:$0xff]
    %v63 = vld [vmem:[%s3 + $0x8] sm:$0xff]
    %v64 = vld [vmem:[%s3 + $0x10] sm:$0xff]
    %v65 = vld [vmem:[%s3 + $0x18] sm:$0xff]
    %v66 = vld [vmem:[%s3 + $0x20] sm:$0xff]
    %v67 = vld [vmem:[%s3 + $0x28] sm:$0xff]
    %v68 = vld [vmem:[%s3 + $0x30] sm:$0xff]
    %v69 = vld [vmem:[%s3 + $0x38] sm:$0xff]
    %v70 = vld [vmem:[%s3 + $0x40] sm:$0xff]
    %v71 = vld [vmem:[%s3 + $0x48] sm:$0xff]
    %v72 = vld [vmem:[%s3 + $0x50] sm:$0xff]
    %v73 = vld [vmem:[%s3 + $0x58] sm:$0xff]
    %v74 = vld [vmem:[%s3 + $0x60] sm:$0xff]
    %v75 = vld [vmem:[%s3 + $0x68] sm:$0xff]
    %v76 = vld [vmem:[%s3 + $0x70] sm:$0xff]
    %v77 = vld [vmem:[%s3 + $0x78] sm:$0xff]
    %v78 = vld [vmem:[%s3 + $0x80] sm:$0xff]
    %v79 = vld [vmem:[%s3 + $0x88] sm:$0xff]
    %v80 = vld [vmem:[%s3 + $0x90] sm:$0xff]
    %v81 = vld [vmem:[%s3 + $0x98] sm:$0xff]
    %v82 = vld [vmem:[%s3 + $0xa0] sm:$0xff]
    %v83 = vld [vmem:[%s3 + $0xa8] sm:$0xff]
    %v84 = vld [vmem:[%s3 + $0xb0] sm:$0xff]
    %v85 = vld [vmem:[%s3 + $0xb8] sm:$0xff]
    %v86 = vld [vmem:[%s3 + $0xc0] sm:$0xff]
    %v87 = vld [vmem:[%s3 + $0xc8] sm:$0xff]
    %v88 = vld [vmem:[%s3 + $0xd0] sm:$0xff]
    %v89 = vld [vmem:[%s3 + $0xd8] sm:$0xff]
    %v90 = vld [vmem:[%s3 + $0xe0] sm:$0xff]
    %v91 = vld [vmem:[%s3 + $0xe8] sm:$0xff]
    %v92 = vld [vmem:[%s3 + $0xf0] sm:$0xff]
    %v93 = vld [vmem:[%s3 + $0xf8] sm:$0xff]
    %v94 = vld [vmem:[#allocation2] sm:$0xff]
    %v95 = vld [vmem:[#allocation2 + $0x8] sm:$0xff]
    %v96 = vld [vmem:[#allocation2 + $0x10] sm:$0xff]
    %v97 = vld [vmem:[#allocation2 + $0x18] sm:$0xff]
    %v98 = vld [vmem:[#allocation2 + $0x20] sm:$0xff]
    %v99 = vld [vmem:[#allocation2 + $0x28] sm:$0xff]
    %v100 = vld [vmem:[#allocation2 + $0x30] sm:$0xff]
    %v101 = vld [vmem:[#allocation2 + $0x38] sm:$0xff]
    %v102 = vld [vmem:[#allocation2 + $0x40] sm:$0xff]
    %v103 = vld [vmem:[#allocation2 + $0x48] sm:$0xff]
    %v104 = vld [vmem:[#allocation2 + $0x50] sm:$0xff]
    %v105 = vld [vmem:[#allocation2 + $0x58] sm:$0xff]
    %v106 = vld [vmem:[#allocation2 + $0x60] sm:$0xff]
    %v107 = vld [vmem:[#allocation2 + $0x68] sm:$0xff]
    %v108 = vld [vmem:[#allocation2 + $0x70] sm:$0xff]
    %v109 = vld [vmem:[#allocation2 + $0x78] sm:$0xff]
    %v110 = vld [vmem:[#allocation2 + $0x80] sm:$0xff]
    %v111 = vld [vmem:[#allocation2 + $0x88] sm:$0xff]
    %v112 = vld [vmem:[#allocation2 + $0x90] sm:$0xff]
    %v113 = vld [vmem:[#allocation2 + $0x98] sm:$0xff]
    %v114 = vld [vmem:[#allocation2 + $0xa0] sm:$0xff]
    %v115 = vld [vmem:[#allocation2 + $0xa8] sm:$0xff]
    %v116 = vld [vmem:[#allocation2 + $0xb0] sm:$0xff]
    %v117 = vld [vmem:[#allocation2 + $0xb8] sm:$0xff]
    %v118 = vld [vmem:[#allocation2 + $0xc0] sm:$0xff]
    %v119 = vld [vmem:[#allocation2 + $0xc8] sm:$0xff]
    %v120 = vld [vmem:[#allocation2 + $0xd0] sm:$0xff]
    %v121 = vld [vmem:[#allocation2 + $0xd8] sm:$0xff]
    %v122 = vld [vmem:[#allocation2 + $0xe0] sm:$0xff]
    %v123 = vld [vmem:[#allocation2 + $0xe8] sm:$0xff]
    %v124 = vld [vmem:[#allocation2 + $0xf0] sm:$0xff]
    %v125 = vld [vmem:[#allocation2 + $0xf8] sm:$0xff]
    %v126 = vld [vmem:[#allocation2 + $0x100] sm:$0xff]
    %v127 = vld [vmem:[#allocation2 + $0x108] sm:$0xff]
    %v128 = vld [vmem:[#allocation2 + $0x110] sm:$0xff]
    %v129 = vld [vmem:[#allocation2 + $0x118] sm:$0xff]
    %v130 = vld [vmem:[#allocation2 + $0x120] sm:$0xff]
    %v131 = vld [vmem:[#allocation2 + $0x128] sm:$0xff]
    %v132 = vld [vmem:[#allocation2 + $0x130] sm:$0xff]
    %v133 = vld [vmem:[#allocation2 + $0x138] sm:$0xff]
    %v134 = vld [vmem:[#allocation2 + $0x140] sm:$0xff]
    %v135 = vld [vmem:[#allocation2 + $0x148] sm:$0xff]
    %v136 = vld [vmem:[#allocation2 + $0x150] sm:$0xff]
    %v137 = vld [vmem:[#allocation2 + $0x158] sm:$0xff]
    %v138 = vld [vmem:[#allocation2 + $0x160] sm:$0xff]
    %v139 = vld [vmem:[#allocation2 + $0x168] sm:$0xff]
    %v140 = vld [vmem:[#allocation2 + $0x170] sm:$0xff]
    %v141 = vld [vmem:[#allocation2 + $0x178] sm:$0xff]
    %v142 = vld [vmem:[#allocation2 + $0x180] sm:$0xff]
    %v143 = vld [vmem:[#allocation2 + $0x188] sm:$0xff]
    %v144 = vld [vmem:[#allocation2 + $0x190] sm:$0xff]
    %v145 = vld [vmem:[#allocation2 + $0x198] sm:$0xff]
    %v146 = vld [vmem:[#allocation2 + $0x1a0] sm:$0xff]
    %v147 = vld [vmem:[#allocation2 + $0x1a8] sm:$0xff]
    %v148 = vld [vmem:[#allocation2 + $0x1b0] sm:$0xff]
    %v149 = vld [vmem:[#allocation2 + $0x1b8] sm:$0xff]
    %v150 = vld [vmem:[#allocation2 + $0x1c0] sm:$0xff]
    %v151 = vld [vmem:[#allocation2 + $0x1c8] sm:$0xff]
    %v152 = vld [vmem:[#allocation2 + $0x1d0] sm:$0xff]
    %v153 = vld [vmem:[#allocation2 + $0x1d8] sm:$0xff]
    %v154 = vld [vmem:[#allocation2 + $0x1e0] sm:$0xff]
    %v155 = vld [vmem:[#allocation2 + $0x1e8] sm:$0xff]
    %v156 = vld [vmem:[#allocation2 + $0x1f0] sm:$0xff]
    %v157 = vld [vmem:[#allocation2 + $0x1f8] sm:$0xff]
    %159 = vset.pattern.permute.xlu0 0
    %160 = vperm.xlu0 %159, %v62
    %v161 = vpop.permute.xlu0 %160
    %164 = vset.pattern.permute.xlu0 0
    %165 = vperm.xlu0 %164, %v63
    %v166 = vpop.permute.xlu0 %165
    %169 = vset.pattern.permute.xlu0 0
    %170 = vperm.xlu0 %169, %v64
    %v171 = vpop.permute.xlu0 %170
    %174 = vset.pattern.permute.xlu0 0
    %175 = vperm.xlu0 %174, %v65
    %v176 = vpop.permute.xlu0 %175
    %179 = vset.pattern.permute.xlu0 0
    %180 = vperm.xlu0 %179, %v66
    %v181 = vpop.permute.xlu0 %180
    %184 = vset.pattern.permute.xlu0 0
    %185 = vperm.xlu0 %184, %v67
    %v186 = vpop.permute.xlu0 %185
    %189 = vset.pattern.permute.xlu0 0
    %190 = vperm.xlu0 %189, %v68
    %v191 = vpop.permute.xlu0 %190
    %194 = vset.pattern.permute.xlu0 0
    %195 = vperm.xlu0 %194, %v69
    %v196 = vpop.permute.xlu0 %195
    %199 = vset.pattern.permute.xlu0 0
    %200 = vperm.xlu0 %199, %v70
    %v201 = vpop.permute.xlu0 %200
    %204 = vset.pattern.permute.xlu0 0
    %205 = vperm.xlu0 %204, %v71
    %v206 = vpop.permute.xlu0 %205
    %209 = vset.pattern.permute.xlu0 0
    %210 = vperm.xlu0 %209, %v72
    %v211 = vpop.permute.xlu0 %210
    %214 = vset.pattern.permute.xlu0 0
    %215 = vperm.xlu0 %214, %v73
    %v216 = vpop.permute.xlu0 %215
    %219 = vset.pattern.permute.xlu0 0
    %220 = vperm.xlu0 %219, %v74
    %v221 = vpop.permute.xlu0 %220
    %224 = vset.pattern.permute.xlu0 0
    %225 = vperm.xlu0 %224, %v75
    %v226 = vpop.permute.xlu0 %225
    %229 = vset.pattern.permute.xlu0 0
    %230 = vperm.xlu0 %229, %v76
    %v231 = vpop.permute.xlu0 %230
    %234 = vset.pattern.permute.xlu0 0
    %235 = vperm.xlu0 %234, %v77
    %v236 = vpop.permute.xlu0 %235
    %239 = vset.pattern.permute.xlu0 0
    %240 = vperm.xlu0 %239, %v78
    %v241 = vpop.permute.xlu0 %240
    %244 = vset.pattern.permute.xlu0 0
    %245 = vperm.xlu0 %244, %v79
    %v246 = vpop.permute.xlu0 %245
    %249 = vset.pattern.permute.xlu0 0
    %250 = vperm.xlu0 %249, %v80
    %v251 = vpop.permute.xlu0 %250
    %254 = vset.pattern.permute.xlu0 0
    %255 = vperm.xlu0 %254, %v81
    %v256 = vpop.permute.xlu0 %255
    %259 = vset.pattern.permute.xlu0 0
    %260 = vperm.xlu0 %259, %v82
    %v261 = vpop.permute.xlu0 %260
    %264 = vset.pattern.permute.xlu0 0
    %265 = vperm.xlu0 %264, %v83
    %v266 = vpop.permute.xlu0 %265
    %269 = vset.pattern.permute.xlu0 0
    %270 = vperm.xlu0 %269, %v84
    %v271 = vpop.permute.xlu0 %270
    %274 = vset.pattern.permute.xlu0 0
    %275 = vperm.xlu0 %274, %v85
    %v276 = vpop.permute.xlu0 %275
    %279 = vset.pattern.permute.xlu0 0
    %280 = vperm.xlu0 %279, %v86
    %v281 = vpop.permute.xlu0 %280
    %284 = vset.pattern.permute.xlu0 0
    %285 = vperm.xlu0 %284, %v87
    %v286 = vpop.permute.xlu0 %285
    %289 = vset.pattern.permute.xlu0 0
    %290 = vperm.xlu0 %289, %v88
    %v291 = vpop.permute.xlu0 %290
    %294 = vset.pattern.permute.xlu0 0
    %295 = vperm.xlu0 %294, %v89
    %v296 = vpop.permute.xlu0 %295
    %299 = vset.pattern.permute.xlu0 0
    %300 = vperm.xlu0 %299, %v90
    %v301 = vpop.permute.xlu0 %300
    %304 = vset.pattern.permute.xlu0 0
    %305 = vperm.xlu0 %304, %v91
    %v306 = vpop.permute.xlu0 %305
    %309 = vset.pattern.permute.xlu0 0
    %310 = vperm.xlu0 %309, %v92
    %v311 = vpop.permute.xlu0 %310
    %314 = vset.pattern.permute.xlu0 0
    %315 = vperm.xlu0 %314, %v93
    %v316 = vpop.permute.xlu0 %315
    %v318 = vmul.f32 %v161, %v94
    %v319 = vmul.f32 %v161, %v95
    %v320 = vmul.f32 %v166, %v96
    %v321 = vmul.f32 %v166, %v97
    %v322 = vmul.f32 %v171, %v98
    %v323 = vmul.f32 %v171, %v99
    %v324 = vmul.f32 %v176, %v100
    %v325 = vmul.f32 %v176, %v101
    %v326 = vmul.f32 %v181, %v102
    %v327 = vmul.f32 %v181, %v103
    %v328 = vmul.f32 %v186, %v104
    %v329 = vmul.f32 %v186, %v105
    %v330 = vmul.f32 %v191, %v106
    %v331 = vmul.f32 %v191, %v107
    %v332 = vmul.f32 %v196, %v108
    %v333 = vmul.f32 %v196, %v109
    %v334 = vmul.f32 %v201, %v110
    %v335 = vmul.f32 %v201, %v111
    %v336 = vmul.f32 %v206, %v112
    %v337 = vmul.f32 %v206, %v113
    %v338 = vmul.f32 %v211, %v114
    %v339 = vmul.f32 %v211, %v115
    %v340 = vmul.f32 %v216, %v116
    %v341 = vmul.f32 %v216, %v117
    %v342 = vmul.f32 %v221, %v118
    %v343 = vmul.f32 %v221, %v119
    %v344 = vmul.f32 %v226, %v120
    %v345 = vmul.f32 %v226, %v121
    %v346 = vmul.f32 %v231, %v122
    %v347 = vmul.f32 %v231, %v123
    %v348 = vmul.f32 %v236, %v124
    %v349 = vmul.f32 %v236, %v125
    %v350 = vmul.f32 %v241, %v126
    %v351 = vmul.f32 %v241, %v127
    %v352 = vmul.f32 %v246, %v128
    %v353 = vmul.f32 %v246, %v129
    %v354 = vmul.f32 %v251, %v130
    %v355 = vmul.f32 %v251, %v131
    %v356 = vmul.f32 %v256, %v132
    %v357 = vmul.f32 %v256, %v133
    %v358 = vmul.f32 %v261, %v134
    %v359 = vmul.f32 %v261, %v135
    %v360 = vmul.f32 %v266, %v136
    %v361 = vmul.f32 %v266, %v137
    %v362 = vmul.f32 %v271, %v138
    %v363 = vmul.f32 %v271, %v139
    %v364 = vmul.f32 %v276, %v140
    %v365 = vmul.f32 %v276, %v141
    %v366 = vmul.f32 %v281, %v142
    %v367 = vmul.f32 %v281, %v143
    %v368 = vmul.f32 %v286, %v144
    %v369 = vmul.f32 %v286, %v145
    %v370 = vmul.f32 %v291, %v146
    %v371 = vmul.f32 %v291, %v147
    %v372 = vmul.f32 %v296, %v148
    %v373 = vmul.f32 %v296, %v149
    %v374 = vmul.f32 %v301, %v150
    %v375 = vmul.f32 %v301, %v151
    %v376 = vmul.f32 %v306, %v152
    %v377 = vmul.f32 %v306, %v153
    %v378 = vmul.f32 %v311, %v154
    %v379 = vmul.f32 %v311, %v155
    %v380 = vmul.f32 %v316, %v156
    %v381 = vmul.f32 %v316, %v157
    %v382 = vld [vmem:[#allocation5] sm:$0xff]
    %v383 = vld [vmem:[#allocation5 + $0x8] sm:$0xff]
    %v384 = vld [vmem:[#allocation5 + $0x10] sm:$0xff]
    %v385 = vld [vmem:[#allocation5 + $0x18] sm:$0xff]
    %v386 = vld [vmem:[#allocation5 + $0x20] sm:$0xff]
    %v387 = vld [vmem:[#allocation5 + $0x28] sm:$0xff]
    %v388 = vld [vmem:[#allocation5 + $0x30] sm:$0xff]
    %v389 = vld [vmem:[#allocation5 + $0x38] sm:$0xff]
    %v390 = vld [vmem:[#allocation5 + $0x40] sm:$0xff]
    %v391 = vld [vmem:[#allocation5 + $0x48] sm:$0xff]
    %v392 = vld [vmem:[#allocation5 + $0x50] sm:$0xff]
    %v393 = vld [vmem:[#allocation5 + $0x58] sm:$0xff]
    %v394 = vld [vmem:[#allocation5 + $0x60] sm:$0xff]
    %v395 = vld [vmem:[#allocation5 + $0x68] sm:$0xff]
    %v396 = vld [vmem:[#allocation5 + $0x70] sm:$0xff]
    %v397 = vld [vmem:[#allocation5 + $0x78] sm:$0xff]
    %v398 = vld [vmem:[#allocation5 + $0x80] sm:$0xff]
    %v399 = vld [vmem:[#allocation5 + $0x88] sm:$0xff]
    %v400 = vld [vmem:[#allocation5 + $0x90] sm:$0xff]
    %v401 = vld [vmem:[#allocation5 + $0x98] sm:$0xff]
    %v402 = vld [vmem:[#allocation5 + $0xa0] sm:$0xff]
    %v403 = vld [vmem:[#allocation5 + $0xa8] sm:$0xff]
    %v404 = vld [vmem:[#allocation5 + $0xb0] sm:$0xff]
    %v405 = vld [vmem:[#allocation5 + $0xb8] sm:$0xff]
    %v406 = vld [vmem:[#allocation5 + $0xc0] sm:$0xff]
    %v407 = vld [vmem:[#allocation5 + $0xc8] sm:$0xff]
    %v408 = vld [vmem:[#allocation5 + $0xd0] sm:$0xff]
    %v409 = vld [vmem:[#allocation5 + $0xd8] sm:$0xff]
    %v410 = vld [vmem:[#allocation5 + $0xe0] sm:$0xff]
    %v411 = vld [vmem:[#allocation5 + $0xe8] sm:$0xff]
    %v412 = vld [vmem:[#allocation5 + $0xf0] sm:$0xff]
    %v413 = vld [vmem:[#allocation5 + $0xf8] sm:$0xff]
    %v414 = vld [vmem:[#allocation5 + $0x100] sm:$0xff]
    %v415 = vld [vmem:[#allocation5 + $0x108] sm:$0xff]
    %v416 = vld [vmem:[#allocation5 + $0x110] sm:$0xff]
    %v417 = vld [vmem:[#allocation5 + $0x118] sm:$0xff]
    %v418 = vld [vmem:[#allocation5 + $0x120] sm:$0xff]
    %v419 = vld [vmem:[#allocation5 + $0x128] sm:$0xff]
    %v420 = vld [vmem:[#allocation5 + $0x130] sm:$0xff]
    %v421 = vld [vmem:[#allocation5 + $0x138] sm:$0xff]
    %v422 = vld [vmem:[#allocation5 + $0x140] sm:$0xff]
    %v423 = vld [vmem:[#allocation5 + $0x148] sm:$0xff]
    %v424 = vld [vmem:[#allocation5 + $0x150] sm:$0xff]
    %v425 = vld [vmem:[#allocation5 + $0x158] sm:$0xff]
    %v426 = vld [vmem:[#allocation5 + $0x160] sm:$0xff]
    %v427 = vld [vmem:[#allocation5 + $0x168] sm:$0xff]
    %v428 = vld [vmem:[#allocation5 + $0x170] sm:$0xff]
    %v429 = vld [vmem:[#allocation5 + $0x178] sm:$0xff]
    %v430 = vld [vmem:[#allocation5 + $0x180] sm:$0xff]
    %v431 = vld [vmem:[#allocation5 + $0x188] sm:$0xff]
    %v432 = vld [vmem:[#allocation5 + $0x190] sm:$0xff]
    %v433 = vld [vmem:[#allocation5 + $0x198] sm:$0xff]
    %v434 = vld [vmem:[#allocation5 + $0x1a0] sm:$0xff]
    %v435 = vld [vmem:[#allocation5 + $0x1a8] sm:$0xff]
    %v436 = vld [vmem:[#allocation5 + $0x1b0] sm:$0xff]
    %v437 = vld [vmem:[#allocation5 + $0x1b8] sm:$0xff]
    %v438 = vld [vmem:[#allocation5 + $0x1c0] sm:$0xff]
    %v439 = vld [vmem:[#allocation5 + $0x1c8] sm:$0xff]
    %v440 = vld [vmem:[#allocation5 + $0x1d0] sm:$0xff]
    %v441 = vld [vmem:[#allocation5 + $0x1d8] sm:$0xff]
    %v442 = vld [vmem:[#allocation5 + $0x1e0] sm:$0xff]
    %v443 = vld [vmem:[#allocation5 + $0x1e8] sm:$0xff]
    %v444 = vld [vmem:[#allocation5 + $0x1f0] sm:$0xff]
    %v445 = vld [vmem:[#allocation5 + $0x1f8] sm:$0xff]
    %446 = vset.pattern.permute.xlu0 1
    %447 = vperm.xlu0 %446, %v62
    %v448 = vpop.permute.xlu0 %447
    %450 = vset.pattern.permute.xlu0 1
    %451 = vperm.xlu0 %450, %v63
    %v452 = vpop.permute.xlu0 %451
    %454 = vset.pattern.permute.xlu0 1
    %455 = vperm.xlu0 %454, %v64
    %v456 = vpop.permute.xlu0 %455
    %458 = vset.pattern.permute.xlu0 1
    %459 = vperm.xlu0 %458, %v65
    %v460 = vpop.permute.xlu0 %459
    %462 = vset.pattern.permute.xlu0 1
    %463 = vperm.xlu0 %462, %v66
    %v464 = vpop.permute.xlu0 %463
    %466 = vset.pattern.permute.xlu0 1
    %467 = vperm.xlu0 %466, %v67
    %v468 = vpop.permute.xlu0 %467
    %470 = vset.pattern.permute.xlu0 1
    %471 = vperm.xlu0 %470, %v68
    %v472 = vpop.permute.xlu0 %471
    %474 = vset.pattern.permute.xlu0 1
    %475 = vperm.xlu0 %474, %v69
    %v476 = vpop.permute.xlu0 %475
    %478 = vset.pattern.permute.xlu0 1
    %479 = vperm.xlu0 %478, %v70
    %v480 = vpop.permute.xlu0 %479
    %482 = vset.pattern.permute.xlu0 1
    %483 = vperm.xlu0 %482, %v71
    %v484 = vpop.permute.xlu0 %483
    %486 = vset.pattern.permute.xlu0 1
    %487 = vperm.xlu0 %486, %v72
    %v488 = vpop.permute.xlu0 %487
    %490 = vset.pattern.permute.xlu0 1
    %491 = vperm.xlu0 %490, %v73
    %v492 = vpop.permute.xlu0 %491
    %494 = vset.pattern.permute.xlu0 1
    %495 = vperm.xlu0 %494, %v74
    %v496 = vpop.permute.xlu0 %495
    %498 = vset.pattern.permute.xlu0 1
    %499 = vperm.xlu0 %498, %v75
    %v500 = vpop.permute.xlu0 %499
    %502 = vset.pattern.permute.xlu0 1
    %503 = vperm.xlu0 %502, %v76
    %v504 = vpop.permute.xlu0 %503
    %506 = vset.pattern.permute.xlu0 1
    %507 = vperm.xlu0 %506, %v77
    %v508 = vpop.permute.xlu0 %507
    %510 = vset.pattern.permute.xlu0 1
    %511 = vperm.xlu0 %510, %v78
    %v512 = vpop.permute.xlu0 %511
    %514 = vset.pattern.permute.xlu0 1
    %515 = vperm.xlu0 %514, %v79
    %v516 = vpop.permute.xlu0 %515
    %518 = vset.pattern.permute.xlu0 1
    %519 = vperm.xlu0 %518, %v80
    %v520 = vpop.permute.xlu0 %519
    %522 = vset.pattern.permute.xlu0 1
    %523 = vperm.xlu0 %522, %v81
    %v524 = vpop.permute.xlu0 %523
    %526 = vset.pattern.permute.xlu0 1
    %527 = vperm.xlu0 %526, %v82
    %v528 = vpop.permute.xlu0 %527
    %530 = vset.pattern.permute.xlu0 1
    %531 = vperm.xlu0 %530, %v83
    %v532 = vpop.permute.xlu0 %531
    %534 = vset.pattern.permute.xlu0 1
    %535 = vperm.xlu0 %534, %v84
    %v536 = vpop.permute.xlu0 %535
    %538 = vset.pattern.permute.xlu0 1
    %539 = vperm.xlu0 %538, %v85
    %v540 = vpop.permute.xlu0 %539
    %542 = vset.pattern.permute.xlu0 1
    %543 = vperm.xlu0 %542, %v86
    %v544 = vpop.permute.xlu0 %543
    %546 = vset.pattern.permute.xlu0 1
    %547 = vperm.xlu0 %546, %v87
    %v548 = vpop.permute.xlu0 %547
    %550 = vset.pattern.permute.xlu0 1
    %551 = vperm.xlu0 %550, %v88
    %v552 = vpop.permute.xlu0 %551
    %554 = vset.pattern.permute.xlu0 1
    %555 = vperm.xlu0 %554, %v89
    %v556 = vpop.permute.xlu0 %555
    %558 = vset.pattern.permute.xlu0 1
    %559 = vperm.xlu0 %558, %v90
    %v560 = vpop.permute.xlu0 %559
    %562 = vset.pattern.permute.xlu0 1
    %563 = vperm.xlu0 %562, %v91
    %v564 = vpop.permute.xlu0 %563
    %566 = vset.pattern.permute.xlu0 1
    %567 = vperm.xlu0 %566, %v92
    %v568 = vpop.permute.xlu0 %567
    %570 = vset.pattern.permute.xlu0 1
    %571 = vperm.xlu0 %570, %v93
    %v572 = vpop.permute.xlu0 %571
    %v574 = vmul.f32 %v448, %v382
    %v575 = vmul.f32 %v448, %v383
    %v576 = vmul.f32 %v452, %v384
    %v577 = vmul.f32 %v452, %v385
    %v578 = vmul.f32 %v456, %v386
    %v579 = vmul.f32 %v456, %v387
    %v580 = vmul.f32 %v460, %v388
    %v581 = vmul.f32 %v460, %v389
    %v582 = vmul.f32 %v464, %v390
    %v583 = vmul.f32 %v464, %v391
    %v584 = vmul.f32 %v468, %v392
    %v585 = vmul.f32 %v468, %v393
    %v586 = vmul.f32 %v472, %v394
    %v587 = vmul.f32 %v472, %v395
    %v588 = vmul.f32 %v476, %v396
    %v589 = vmul.f32 %v476, %v397
    %v590 = vmul.f32 %v480, %v398
    %v591 = vmul.f32 %v480, %v399
    %v592 = vmul.f32 %v484, %v400
    %v593 = vmul.f32 %v484, %v401
    %v594 = vmul.f32 %v488, %v402
    %v595 = vmul.f32 %v488, %v403
    %v596 = vmul.f32 %v492, %v404
    %v597 = vmul.f32 %v492, %v405
    %v598 = vmul.f32 %v496, %v406
    %v599 = vmul.f32 %v496, %v407
    %v600 = vmul.f32 %v500, %v408
    %v601 = vmul.f32 %v500, %v409
    %v602 = vmul.f32 %v504, %v410
    %v603 = vmul.f32 %v504, %v411
    %v604 = vmul.f32 %v508, %v412
    %v605 = vmul.f32 %v508, %v413
    %v606 = vmul.f32 %v512, %v414
    %v607 = vmul.f32 %v512, %v415
    %v608 = vmul.f32 %v516, %v416
    %v609 = vmul.f32 %v516, %v417
    %v610 = vmul.f32 %v520, %v418
    %v611 = vmul.f32 %v520, %v419
    %v612 = vmul.f32 %v524, %v420
    %v613 = vmul.f32 %v524, %v421
    %v614 = vmul.f32 %v528, %v422
    %v615 = vmul.f32 %v528, %v423
    %v616 = vmul.f32 %v532, %v424
    %v617 = vmul.f32 %v532, %v425
    %v618 = vmul.f32 %v536, %v426
    %v619 = vmul.f32 %v536, %v427
    %v620 = vmul.f32 %v540, %v428
    %v621 = vmul.f32 %v540, %v429
    %v622 = vmul.f32 %v544, %v430
    %v623 = vmul.f32 %v544, %v431
    %v624 = vmul.f32 %v548, %v432
    %v625 = vmul.f32 %v548, %v433
    %v626 = vmul.f32 %v552, %v434
    %v627 = vmul.f32 %v552, %v435
    %v628 = vmul.f32 %v556, %v436
    %v629 = vmul.f32 %v556, %v437
    %v630 = vmul.f32 %v560, %v438
    %v631 = vmul.f32 %v560, %v439
    %v632 = vmul.f32 %v564, %v440
    %v633 = vmul.f32 %v564, %v441
    %v634 = vmul.f32 %v568, %v442
    %v635 = vmul.f32 %v568, %v443
    %v636 = vmul.f32 %v572, %v444
    %v637 = vmul.f32 %v572, %v445
    %v638 = vadd.f32 %v318, %v574
    %v639 = vadd.f32 %v319, %v575
    %v640 = vadd.f32 %v320, %v576
    %v641 = vadd.f32 %v321, %v577
    %v642 = vadd.f32 %v322, %v578
    %v643 = vadd.f32 %v323, %v579
    %v644 = vadd.f32 %v324, %v580
    %v645 = vadd.f32 %v325, %v581
    %v646 = vadd.f32 %v326, %v582
    %v647 = vadd.f32 %v327, %v583
    %v648 = vadd.f32 %v328, %v584
    %v649 = vadd.f32 %v329, %v585
    %v650 = vadd.f32 %v330, %v586
    %v651 = vadd.f32 %v331, %v587
    %v652 = vadd.f32 %v332, %v588
    %v653 = vadd.f32 %v333, %v589
    %v654 = vadd.f32 %v334, %v590
    %v655 = vadd.f32 %v335, %v591
    %v656 = vadd.f32 %v336, %v592
    %v657 = vadd.f32 %v337, %v593
    %v658 = vadd.f32 %v338, %v594
    %v659 = vadd.f32 %v339, %v595
    %v660 = vadd.f32 %v340, %v596
    %v661 = vadd.f32 %v341, %v597
    %v662 = vadd.f32 %v342, %v598
    %v663 = vadd.f32 %v343, %v599
    %v664 = vadd.f32 %v344, %v600
    %v665 = vadd.f32 %v345, %v601
    %v666 = vadd.f32 %v346, %v602
    %v667 = vadd.f32 %v347, %v603
    %v668 = vadd.f32 %v348, %v604
    %v669 = vadd.f32 %v349, %v605
    %v670 = vadd.f32 %v350, %v606
    %v671 = vadd.f32 %v351, %v607
    %v672 = vadd.f32 %v352, %v608
    %v673 = vadd.f32 %v353, %v609
    %v674 = vadd.f32 %v354, %v610
    %v675 = vadd.f32 %v355, %v611
    %v676 = vadd.f32 %v356, %v612
    %v677 = vadd.f32 %v357, %v613
    %v678 = vadd.f32 %v358, %v614
    %v679 = vadd.f32 %v359, %v615
    %v680 = vadd.f32 %v360, %v616
    %v681 = vadd.f32 %v361, %v617
    %v682 = vadd.f32 %v362, %v618
    %v683 = vadd.f32 %v363, %v619
    %v684 = vadd.f32 %v364, %v620
    %v685 = vadd.f32 %v365, %v621
    %v686 = vadd.f32 %v366, %v622
    %v687 = vadd.f32 %v367, %v623
    %v688 = vadd.f32 %v368, %v624
    %v689 = vadd.f32 %v369, %v625
    %v690 = vadd.f32 %v370, %v626
    %v691 = vadd.f32 %v371, %v627
    %v692 = vadd.f32 %v372, %v628
    %v693 = vadd.f32 %v373, %v629
    %v694 = vadd.f32 %v374, %v630
    %v695 = vadd.f32 %v375, %v631
    %v696 = vadd.f32 %v376, %v632
    %v697 = vadd.f32 %v377, %v633
    %v698 = vadd.f32 %v378, %v634
    %v699 = vadd.f32 %v379, %v635
    %v700 = vadd.f32 %v380, %v636
    %v701 = vadd.f32 %v381, %v637
    %v702 = vpack.c.bf16 %v640, %v638
    %v703 = vpack.c.bf16 %v641, %v639
    %v704 = vpack.c.bf16 %v644, %v642
    %v705 = vpack.c.bf16 %v645, %v643
    %v706 = vpack.c.bf16 %v648, %v646
    %v707 = vpack.c.bf16 %v649, %v647
    %v708 = vpack.c.bf16 %v652, %v650
    %v709 = vpack.c.bf16 %v653, %v651
    %v710 = vpack.c.bf16 %v656, %v654
    %v711 = vpack.c.bf16 %v657, %v655
    %v712 = vpack.c.bf16 %v660, %v658
    %v713 = vpack.c.bf16 %v661, %v659
    %v714 = vpack.c.bf16 %v664, %v662
    %v715 = vpack.c.bf16 %v665, %v663
    %v716 = vpack.c.bf16 %v668, %v666
    %v717 = vpack.c.bf16 %v669, %v667
    %v718 = vpack.c.bf16 %v672, %v670
    %v719 = vpack.c.bf16 %v673, %v671
    %v720 = vpack.c.bf16 %v676, %v674
    %v721 = vpack.c.bf16 %v677, %v675
    %v722 = vpack.c.bf16 %v680, %v678
    %v723 = vpack.c.bf16 %v681, %v679
    %v724 = vpack.c.bf16 %v684, %v682
    %v725 = vpack.c.bf16 %v685, %v683
    %v726 = vpack.c.bf16 %v688, %v686
    %v727 = vpack.c.bf16 %v689, %v687
    %v728 = vpack.c.bf16 %v692, %v690
    %v729 = vpack.c.bf16 %v693, %v691
    %v730 = vpack.c.bf16 %v696, %v694
    %v731 = vpack.c.bf16 %v697, %v695
    %v732 = vpack.c.bf16 %v700, %v698
    %v733 = vpack.c.bf16 %v701, %v699
    %v734 = vld [vmem:[%s4] sm:$0xf]
    %v735 = vld [vmem:[%s4 + $0x4] sm:$0xf]
    %v736 = vld [vmem:[%s4 + $0x8] sm:$0xf]
    %v737 = vld [vmem:[%s4 + $0xc] sm:$0xf]
    %v738 = vld [vmem:[%s4 + $0x10] sm:$0xf]
    %v739 = vld [vmem:[%s4 + $0x14] sm:$0xf]
    %v740 = vld [vmem:[%s4 + $0x18] sm:$0xf]
    %v741 = vld [vmem:[%s4 + $0x1c] sm:$0xf]
    %v742 = vld [vmem:[%s4 + $0x20] sm:$0xf]
    %v743 = vld [vmem:[%s4 + $0x24] sm:$0xf]
    %v744 = vld [vmem:[%s4 + $0x28] sm:$0xf]
    %v745 = vld [vmem:[%s4 + $0x2c] sm:$0xf]
    %v746 = vld [vmem:[%s4 + $0x30] sm:$0xf]
    %v747 = vld [vmem:[%s4 + $0x34] sm:$0xf]
    %v748 = vld [vmem:[%s4 + $0x38] sm:$0xf]
    %v749 = vld [vmem:[%s4 + $0x3c] sm:$0xf]
    %v750 = vld [vmem:[%s4 + $0x40] sm:$0xf]
    %v751 = vld [vmem:[%s4 + $0x44] sm:$0xf]
    %v752 = vld [vmem:[%s4 + $0x48] sm:$0xf]
    %v753 = vld [vmem:[%s4 + $0x4c] sm:$0xf]
    %v754 = vld [vmem:[%s4 + $0x50] sm:$0xf]
    %v755 = vld [vmem:[%s4 + $0x54] sm:$0xf]
    %v756 = vld [vmem:[%s4 + $0x58] sm:$0xf]
    %v757 = vld [vmem:[%s4 + $0x5c] sm:$0xf]
    %v758 = vld [vmem:[%s4 + $0x60] sm:$0xf]
    %v759 = vld [vmem:[%s4 + $0x64] sm:$0xf]
    %v760 = vld [vmem:[%s4 + $0x68] sm:$0xf]
    %v761 = vld [vmem:[%s4 + $0x6c] sm:$0xf]
    %v762 = vld [vmem:[%s4 + $0x70] sm:$0xf]
    %v763 = vld [vmem:[%s4 + $0x74] sm:$0xf]
    %v764 = vld [vmem:[%s4 + $0x78] sm:$0xf]
    %v765 = vld [vmem:[%s4 + $0x7c] sm:$0xf]
    %v766 = vld [vmem:[%s2] sm:$0xf]
    %v767 = vld [vmem:[%s2 + $0x4] sm:$0xf]
    %v768 = vld [vmem:[%s2 + $0x8] sm:$0xf]
    %v769 = vld [vmem:[%s2 + $0xc] sm:$0xf]
    %v770 = vld [vmem:[%s2 + $0x10] sm:$0xf]
    %v771 = vld [vmem:[%s2 + $0x14] sm:$0xf]
    %v772 = vld [vmem:[%s2 + $0x18] sm:$0xf]
    %v773 = vld [vmem:[%s2 + $0x1c] sm:$0xf]
    %v774 = vld [vmem:[%s2 + $0x20] sm:$0xf]
    %v775 = vld [vmem:[%s2 + $0x24] sm:$0xf]
    %v776 = vld [vmem:[%s2 + $0x28] sm:$0xf]
    %v777 = vld [vmem:[%s2 + $0x2c] sm:$0xf]
    %v778 = vld [vmem:[%s2 + $0x30] sm:$0xf]
    %v779 = vld [vmem:[%s2 + $0x34] sm:$0xf]
    %v780 = vld [vmem:[%s2 + $0x38] sm:$0xf]
    %v781 = vld [vmem:[%s2 + $0x3c] sm:$0xf]
    %v782 = vld [vmem:[%s2 + $0x40] sm:$0xf]
    %v783 = vld [vmem:[%s2 + $0x44] sm:$0xf]
    %v784 = vld [vmem:[%s2 + $0x48] sm:$0xf]
    %v785 = vld [vmem:[%s2 + $0x4c] sm:$0xf]
    %v786 = vld [vmem:[%s2 + $0x50] sm:$0xf]
    %v787 = vld [vmem:[%s2 + $0x54] sm:$0xf]
    %v788 = vld [vmem:[%s2 + $0x58] sm:$0xf]
    %v789 = vld [vmem:[%s2 + $0x5c] sm:$0xf]
    %v790 = vld [vmem:[%s2 + $0x60] sm:$0xf]
    %v791 = vld [vmem:[%s2 + $0x64] sm:$0xf]
    %v792 = vld [vmem:[%s2 + $0x68] sm:$0xf]
    %v793 = vld [vmem:[%s2 + $0x6c] sm:$0xf]
    %v794 = vld [vmem:[%s2 + $0x70] sm:$0xf]
    %v795 = vld [vmem:[%s2 + $0x74] sm:$0xf]
    %v796 = vld [vmem:[%s2 + $0x78] sm:$0xf]
    %v797 = vld [vmem:[%s2 + $0x7c] sm:$0xf]
    %v798 = vld [vmem:[%s5] sm:$0xf]
    %v799 = vld [vmem:[%s5 + $0x4] sm:$0xf]
    %v800 = vld [vmem:[%s5 + $0x8] sm:$0xf]
    %v801 = vld [vmem:[%s5 + $0xc] sm:$0xf]
    %v834 = vunpack.c.l.b16 %v766
    %v835 = vunpack.c.l.b16 %v767
    %v836 = vunpack.c.l.b16 %v768
    %v837 = vunpack.c.l.b16 %v769
    %v838 = vunpack.c.l.b16 %v770
    %v839 = vunpack.c.l.b16 %v771
    %v840 = vunpack.c.l.b16 %v772
    %v841 = vunpack.c.l.b16 %v773
    %v842 = vunpack.c.l.b16 %v774
    %v843 = vunpack.c.l.b16 %v775
    %v844 = vunpack.c.l.b16 %v776
    %v845 = vunpack.c.l.b16 %v777
    %v846 = vunpack.c.l.b16 %v778
    %v847 = vunpack.c.l.b16 %v779
    %v848 = vunpack.c.l.b16 %v780
    %v849 = vunpack.c.l.b16 %v781
    %v850 = vunpack.c.l.b16 %v782
    %v851 = vunpack.c.l.b16 %v783
    %v852 = vunpack.c.l.b16 %v784
    %v853 = vunpack.c.l.b16 %v785
    %v854 = vunpack.c.l.b16 %v786
    %v855 = vunpack.c.l.b16 %v787
    %v856 = vunpack.c.l.b16 %v788
    %v857 = vunpack.c.l.b16 %v789
    %v858 = vunpack.c.l.b16 %v790
    %v859 = vunpack.c.l.b16 %v791
    %v860 = vunpack.c.l.b16 %v792
    %v861 = vunpack.c.l.b16 %v793
    %v862 = vunpack.c.l.b16 %v794
    %v863 = vunpack.c.l.b16 %v795
    %v864 = vunpack.c.l.b16 %v796
    %v865 = vunpack.c.l.b16 %v797
    %v866 = vpack.c.b16 %v835, %v834
    %v867 = vpack.c.b16 %v837, %v836
    %v868 = vpack.c.b16 %v839, %v838
    %v869 = vpack.c.b16 %v841, %v840
    %v870 = vpack.c.b16 %v843, %v842
    %v871 = vpack.c.b16 %v845, %v844
    %v872 = vpack.c.b16 %v847, %v846
    %v873 = vpack.c.b16 %v849, %v848
    %v874 = vpack.c.b16 %v851, %v850
    %v875 = vpack.c.b16 %v853, %v852
    %v876 = vpack.c.b16 %v855, %v854
    %v877 = vpack.c.b16 %v857, %v856
    %v878 = vpack.c.b16 %v859, %v858
    %v879 = vpack.c.b16 %v861, %v860
    %v880 = vpack.c.b16 %v863, %v862
    %v881 = vpack.c.b16 %v865, %v864
    %v886 = vunpack.c.l.b16 %v798
    %v887 = vunpack.c.l.b16 %v799
    %v888 = vunpack.c.l.b16 %v800
    %v889 = vunpack.c.l.b16 %v801
    %v890 = vpack.c.b16 %v887, %v886
    %v891 = vpack.c.b16 %v889, %v888
    %vm894 = vcmask 261120
    %v896 = vsel %vm894, %v866, 0
    %v899 = vsel %vm894, %v867, 0
    %v902 = vsel %vm894, %v868, 0
    %v905 = vsel %vm894, %v869, 0
    %v908 = vsel %vm894, %v870, 0
    %v911 = vsel %vm894, %v871, 0
    %v914 = vsel %vm894, %v872, 0
    %v917 = vsel %vm894, %v873, 0
    %v920 = vsel %vm894, %v874, 0
    %v923 = vsel %vm894, %v875, 0
    %v926 = vsel %vm894, %v876, 0
    %v929 = vsel %vm894, %v877, 0
    %v932 = vsel %vm894, %v878, 0
    %v935 = vsel %vm894, %v879, 0
    %v938 = vsel %vm894, %v880, 0
    %v941 = vsel %vm894, %v881, 0
    %943 = vmatprep.subr.bf16.mxu0 0
    %944 = vmatpush1.bf16.msra.mxu0 %v890
    %945 = vmatprep.subr.bf16.mxu0 0
    %946 = vmatpush1.bf16.msra.mxu0 %v891
    %947 = vmatprep.subr.bf16.mxu0 0
    %948 = vmatpush1.bf16.msra.mxu0 0
    %949 = vmatprep.subr.bf16.mxu0 0
    %950 = vmatpush1.bf16.msra.mxu0 0
    %951 = vmatprep.subr.bf16.mxu0 0
    %952 = vmatpush1.bf16.msra.mxu0 0
    %953 = vmatprep.subr.bf16.mxu0 0
    %954 = vmatpush1.bf16.msra.mxu0 0
    %955 = vmatprep.subr.bf16.mxu0 0
    %956 = vmatpush1.bf16.msra.mxu0 0
    %957 = vmatprep.subr.bf16.mxu0 0
    %958 = vmatpush1.bf16.msra.mxu0 0
    %959 = vmatprep.subr.bf16.mxu0 0
    %960 = vmatpush1.bf16.msra.mxu0 0
    %961 = vmatprep.subr.bf16.mxu0 0
    %962 = vmatpush1.bf16.msra.mxu0 0
    %963 = vmatprep.subr.bf16.mxu0 0
    %964 = vmatpush1.bf16.msra.mxu0 0
    %965 = vmatprep.subr.bf16.mxu0 0
    %966 = vmatpush1.bf16.msra.mxu0 0
    %967 = vmatprep.subr.bf16.mxu0 0
    %968 = vmatpush1.bf16.msra.mxu0 0
    %969 = vmatprep.subr.bf16.mxu0 0
    %970 = vmatpush1.bf16.msra.mxu0 0
    %971 = vmatprep.subr.bf16.mxu0 0
    %972 = vmatpush1.bf16.msra.mxu0 0
    %973 = vmatprep.subr.bf16.mxu0 0
    %974 = vmatpush1.bf16.msra.mxu0 0
    %975 = vmatprep.mubr.bf16.mxu0 0
    %976 = vmatmul.mubr.bf16.gmra.mrb[0].mxu0 %v896
    %v977 = vpop.f32.mrb[0].mxu0
    %v978 = vadd.f32 0.0, %v977
    %v979 = vpop.f32.mrb[0].mxu0
    %v980 = vpop.f32.mrb[0].mxu0
    %v981 = vadd.f32 0.0, %v980
    %v982 = vpop.f32.mrb[0].mxu0
    %983 = vmatprep.mubr.bf16.mxu0 0
    %984 = vmatmul.mubr.bf16.gmra.mrb[0].mxu0 %v899
    %v985 = vpop.f32.mrb[0].mxu0
    %v986 = vadd.f32 0.0, %v985
    %v987 = vpop.f32.mrb[0].mxu0
    %v988 = vpop.f32.mrb[0].mxu0
    %v989 = vadd.f32 0.0, %v988
    %v990 = vpop.f32.mrb[0].mxu0
    %991 = vmatprep.mubr.bf16.mxu0 0
    %992 = vmatmul.mubr.bf16.gmra.mrb[0].mxu0 %v902
    %v993 = vpop.f32.mrb[0].mxu0
    %v994 = vadd.f32 0.0, %v993
    %v995 = vpop.f32.mrb[0].mxu0
    %v996 = vpop.f32.mrb[0].mxu0
    %v997 = vadd.f32 0.0, %v996
    %v998 = vpop.f32.mrb[0].mxu0
    %999 = vmatprep.mubr.bf16.mxu0 0
    %1000 = vmatmul.mubr.bf16.gmra.mrb[0].mxu0 %v905
    %v1001 = vpop.f32.mrb[0].mxu0
    %v1002 = vadd.f32 0.0, %v1001
    %v1003 = vpop.f32.mrb[0].mxu0
    %v1004 = vpop.f32.mrb[0].mxu0
    %v1005 = vadd.f32 0.0, %v1004
    %v1006 = vpop.f32.mrb[0].mxu0
    %1007 = vmatprep.mubr.bf16.mxu0 0
    %1008 = vmatmul.mubr.bf16.gmra.mrb[0].mxu0 %v908
    %v1009 = vpop.f32.mrb[0].mxu0
    %v1010 = vadd.f32 0.0, %v1009
    %v1011 = vpop.f32.mrb[0].mxu0
    %v1012 = vpop.f32.mrb[0].mxu0
    %v1013 = vadd.f32 0.0, %v1012
    %v1014 = vpop.f32.mrb[0].mxu0
    %1015 = vmatprep.mubr.bf16.mxu0 0
    %1016 = vmatmul.mubr.bf16.gmra.mrb[0].mxu0 %v911
    %v1017 = vpop.f32.mrb[0].mxu0
    %v1018 = vadd.f32 0.0, %v1017
    %v1019 = vpop.f32.mrb[0].mxu0
    %v1020 = vpop.f32.mrb[0].mxu0
    %v1021 = vadd.f32 0.0, %v1020
    %v1022 = vpop.f32.mrb[0].mxu0
    %1023 = vmatprep.mubr.bf16.mxu0 0
    %1024 = vmatmul.mubr.bf16.gmra.mrb[0].mxu0 %v914
    %v1025 = vpop.f32.mrb[0].mxu0
    %v1026 = vadd.f32 0.0, %v1025
    %v1027 = vpop.f32.mrb[0].mxu0
    %v1028 = vpop.f32.mrb[0].mxu0
    %v1029 = vadd.f32 0.0, %v1028
    %v1030 = vpop.f32.mrb[0].mxu0
    %1031 = vmatprep.mubr.bf16.mxu0 0
    %1032 = vmatmul.mubr.bf16.gmra.mrb[0].mxu0 %v917
    %v1033 = vpop.f32.mrb[0].mxu0
    %v1034 = vadd.f32 0.0, %v1033
    %v1035 = vpop.f32.mrb[0].mxu0
    %v1036 = vpop.f32.mrb[0].mxu0
    %v1037 = vadd.f32 0.0, %v1036
    %v1038 = vpop.f32.mrb[0].mxu0
    %1039 = vmatprep.mubr.bf16.mxu0 0
    %1040 = vmatmul.mubr.bf16.gmra.mrb[0].mxu0 %v920
    %v1041 = vpop.f32.mrb[0].mxu0
    %v1042 = vadd.f32 0.0, %v1041
    %v1043 = vpop.f32.mrb[0].mxu0
    %v1044 = vpop.f32.mrb[0].mxu0
    %v1045 = vadd.f32 0.0, %v1044
    %v1046 = vpop.f32.mrb[0].mxu0
    %1047 = vmatprep.mubr.bf16.mxu0 0
    %1048 = vmatmul.mubr.bf16.gmra.mrb[0].mxu0 %v923
    %v1049 = vpop.f32.mrb[0].mxu0
    %v1050 = vadd.f32 0.0, %v1049
    %v1051 = vpop.f32.mrb[0].mxu0
    %v1052 = vpop.f32.mrb[0].mxu0
    %v1053 = vadd.f32 0.0, %v1052
    %v1054 = vpop.f32.mrb[0].mxu0
    %1055 = vmatprep.mubr.bf16.mxu0 0
    %1056 = vmatmul.mubr.bf16.gmra.mrb[0].mxu0 %v926
    %v1057 = vpop.f32.mrb[0].mxu0
    %v1058 = vadd.f32 0.0, %v1057
    %v1059 = vpop.f32.mrb[0].mxu0
    %v1060 = vpop.f32.mrb[0].mxu0
    %v1061 = vadd.f32 0.0, %v1060
    %v1062 = vpop.f32.mrb[0].mxu0
    %1063 = vmatprep.mubr.bf16.mxu0 0
    %1064 = vmatmul.mubr.bf16.gmra.mrb[0].mxu0 %v929
    %v1065 = vpop.f32.mrb[0].mxu0
    %v1066 = vadd.f32 0.0, %v1065
    %v1067 = vpop.f32.mrb[0].mxu0
    %v1068 = vpop.f32.mrb[0].mxu0
    %v1069 = vadd.f32 0.0, %v1068
    %v1070 = vpop.f32.mrb[0].mxu0
    %1071 = vmatprep.mubr.bf16.mxu0 0
    %1072 = vmatmul.mubr.bf16.gmra.mrb[0].mxu0 %v932
    %v1073 = vpop.f32.mrb[0].mxu0
    %v1074 = vadd.f32 0.0, %v1073
    %v1075 = vpop.f32.mrb[0].mxu0
    %v1076 = vpop.f32.mrb[0].mxu0
    %v1077 = vadd.f32 0.0, %v1076
    %v1078 = vpop.f32.mrb[0].mxu0
    %1079 = vmatprep.mubr.bf16.mxu0 0
    %1080 = vmatmul.mubr.bf16.gmra.mrb[0].mxu0 %v935
    %v1081 = vpop.f32.mrb[0].mxu0
    %v1082 = vadd.f32 0.0, %v1081
    %v1083 = vpop.f32.mrb[0].mxu0
    %v1084 = vpop.f32.mrb[0].mxu0
    %v1085 = vadd.f32 0.0, %v1084
    %v1086 = vpop.f32.mrb[0].mxu0
    %1087 = vmatprep.mubr.bf16.mxu0 0
    %1088 = vmatmul.mubr.bf16.gmra.mrb[0].mxu0 %v938
    %v1089 = vpop.f32.mrb[0].mxu0
    %v1090 = vadd.f32 0.0, %v1089
    %v1091 = vpop.f32.mrb[0].mxu0
    %v1092 = vpop.f32.mrb[0].mxu0
    %v1093 = vadd.f32 0.0, %v1092
    %v1094 = vpop.f32.mrb[0].mxu0
    %1095 = vmatprep.mubr.bf16.mxu0 0
    %1096 = vmatmul.mubr.bf16.gmra.mrb[0].mxu0 %v941
    %v1097 = vpop.f32.mrb[0].mxu0
    %v1098 = vadd.f32 0.0, %v1097
    %v1099 = vpop.f32.mrb[0].mxu0
    %v1100 = vpop.f32.mrb[0].mxu0
    %v1101 = vadd.f32 0.0, %v1100
    %v1102 = vpop.f32.mrb[0].mxu0
    %1103 = vdwg.mxu0
    %v1136 = vunpack.c.l.b16 %v734
    %v1137 = vunpack.c.l.b16 %v735
    %v1138 = vunpack.c.l.b16 %v736
    %v1139 = vunpack.c.l.b16 %v737
    %v1140 = vunpack.c.l.b16 %v738
    %v1141 = vunpack.c.l.b16 %v739
    %v1142 = vunpack.c.l.b16 %v740
    %v1143 = vunpack.c.l.b16 %v741
    %v1144 = vunpack.c.l.b16 %v742
    %v1145 = vunpack.c.l.b16 %v743
    %v1146 = vunpack.c.l.b16 %v744
    %v1147 = vunpack.c.l.b16 %v745
    %v1148 = vunpack.c.l.b16 %v746
    %v1149 = vunpack.c.l.b16 %v747
    %v1150 = vunpack.c.l.b16 %v748
    %v1151 = vunpack.c.l.b16 %v749
    %v1152 = vunpack.c.l.b16 %v750
    %v1153 = vunpack.c.l.b16 %v751
    %v1154 = vunpack.c.l.b16 %v752
    %v1155 = vunpack.c.l.b16 %v753
    %v1156 = vunpack.c.l.b16 %v754
    %v1157 = vunpack.c.l.b16 %v755
    %v1158 = vunpack.c.l.b16 %v756
    %v1159 = vunpack.c.l.b16 %v757
    %v1160 = vunpack.c.l.b16 %v758
    %v1161 = vunpack.c.l.b16 %v759
    %v1162 = vunpack.c.l.b16 %v760
    %v1163 = vunpack.c.l.b16 %v761
    %v1164 = vunpack.c.l.b16 %v762
    %v1165 = vunpack.c.l.b16 %v763
    %v1166 = vunpack.c.l.b16 %v764
    %v1167 = vunpack.c.l.b16 %v765
    %v1168 = vpack.c.b16 %v1137, %v1136
    %v1169 = vpack.c.b16 %v1139, %v1138
    %v1170 = vpack.c.b16 %v1141, %v1140
    %v1171 = vpack.c.b16 %v1143, %v1142
    %v1172 = vpack.c.b16 %v1145, %v1144
    %v1173 = vpack.c.b16 %v1147, %v1146
    %v1174 = vpack.c.b16 %v1149, %v1148
    %v1175 = vpack.c.b16 %v1151, %v1150
    %v1176 = vpack.c.b16 %v1153, %v1152
    %v1177 = vpack.c.b16 %v1155, %v1154
    %v1178 = vpack.c.b16 %v1157, %v1156
    %v1179 = vpack.c.b16 %v1159, %v1158
    %v1180 = vpack.c.b16 %v1161, %v1160
    %v1181 = vpack.c.b16 %v1163, %v1162
    %v1182 = vpack.c.b16 %v1165, %v1164
    %v1183 = vpack.c.b16 %v1167, %v1166
    %1200 = vmatprep.subr.bf16.mxu0 0
    %1201 = vmatpush1.bf16.msra.mxu0 %v1168
    %1202 = vmatprep.subr.bf16.mxu0 0
    %1203 = vmatpush1.bf16.msra.mxu0 %v1169
    %1204 = vmatprep.subr.bf16.mxu0 0
    %1205 = vmatpush1.bf16.msra.mxu0 %v1170
    %1206 = vmatprep.subr.bf16.mxu0 0
    %1207 = vmatpush1.bf16.msra.mxu0 %v1171
    %1208 = vmatprep.subr.bf16.mxu0 0
    %1209 = vmatpush1.bf16.msra.mxu0 %v1172
    %1210 = vmatprep.subr.bf16.mxu0 0
    %1211 = vmatpush1.bf16.msra.mxu0 %v1173
    %1212 = vmatprep.subr.bf16.mxu0 0
    %1213 = vmatpush1.bf16.msra.mxu0 %v1174
    %1214 = vmatprep.subr.bf16.mxu0 0
    %1215 = vmatpush1.bf16.msra.mxu0 %v1175
    %1216 = vmatprep.subr.bf16.mxu0 0
    %1217 = vmatpush1.bf16.msra.mxu0 %v1176
    %1218 = vmatprep.subr.bf16.mxu0 0
    %1219 = vmatpush1.bf16.msra.mxu0 %v1177
    %1220 = vmatprep.subr.bf16.mxu0 0
    %1221 = vmatpush1.bf16.msra.mxu0 %v1178
    %1222 = vmatprep.subr.bf16.mxu0 0
    %1223 = vmatpush1.bf16.msra.mxu0 %v1179
    %1224 = vmatprep.subr.bf16.mxu0 0
    %1225 = vmatpush1.bf16.msra.mxu0 %v1180
    %1226 = vmatprep.subr.bf16.mxu0 0
    %1227 = vmatpush1.bf16.msra.mxu0 %v1181
    %1228 = vmatprep.subr.bf16.mxu0 0
    %1229 = vmatpush1.bf16.msra.mxu0 %v1182
    %1230 = vmatprep.subr.bf16.mxu0 0
    %1231 = vmatpush1.bf16.msra.mxu0 %v1183
    %1232 = vmatprep.mubr.bf16.mxu0 %v703
    %1233 = vmatmul.mubr.bf16.gmra.mrb[0].mxu0 %v702
    %v1234 = vpop.f32.mrb[0].mxu0
    %v1235 = vadd.f32 %v978, %v1234
    %v1236 = vpop.f32.mrb[0].mxu0
    %v1237 = vpop.f32.mrb[0].mxu0
    %v1238 = vadd.f32 %v981, %v1237
    %v1239 = vpop.f32.mrb[0].mxu0
    %1240 = vmatprep.mubr.bf16.mxu0 %v705
    %1241 = vmatmul.mubr.bf16.gmra.mrb[0].mxu0 %v704
    %v1242 = vpop.f32.mrb[0].mxu0
    %v1243 = vadd.f32 %v986, %v1242
    %v1244 = vpop.f32.mrb[0].mxu0
    %v1245 = vpop.f32.mrb[0].mxu0
    %v1246 = vadd.f32 %v989, %v1245
    %v1247 = vpop.f32.mrb[0].mxu0
    %1248 = vmatprep.mubr.bf16.mxu0 %v707
    %1249 = vmatmul.mubr.bf16.gmra.mrb[0].mxu0 %v706
    %v1250 = vpop.f32.mrb[0].mxu0
    %v1251 = vadd.f32 %v994, %v1250
    %v1252 = vpop.f32.mrb[0].mxu0
    %v1253 = vpop.f32.mrb[0].mxu0
    %v1254 = vadd.f32 %v997, %v1253
    %v1255 = vpop.f32.mrb[0].mxu0
    %1256 = vmatprep.mubr.bf16.mxu0 %v709
    %1257 = vmatmul.mubr.bf16.gmra.mrb[0].mxu0 %v708
    %v1258 = vpop.f32.mrb[0].mxu0
    %v1259 = vadd.f32 %v1002, %v1258
    %v1260 = vpop.f32.mrb[0].mxu0
    %v1261 = vpop.f32.mrb[0].mxu0
    %v1262 = vadd.f32 %v1005, %v1261
    %v1263 = vpop.f32.mrb[0].mxu0
    %1264 = vmatprep.mubr.bf16.mxu0 %v711
    %1265 = vmatmul.mubr.bf16.gmra.mrb[0].mxu0 %v710
    %v1266 = vpop.f32.mrb[0].mxu0
    %v1267 = vadd.f32 %v1010, %v1266
    %v1268 = vpop.f32.mrb[0].mxu0
    %v1269 = vpop.f32.mrb[0].mxu0
    %v1270 = vadd.f32 %v1013, %v1269
    %v1271 = vpop.f32.mrb[0].mxu0
    %1272 = vmatprep.mubr.bf16.mxu0 %v713
    %1273 = vmatmul.mubr.bf16.gmra.mrb[0].mxu0 %v712
    %v1274 = vpop.f32.mrb[0].mxu0
    %v1275 = vadd.f32 %v1018, %v1274
    %v1276 = vpop.f32.mrb[0].mxu0
    %v1277 = vpop.f32.mrb[0].mxu0
    %v1278 = vadd.f32 %v1021, %v1277
    %v1279 = vpop.f32.mrb[0].mxu0
    %1280 = vmatprep.mubr.bf16.mxu0 %v715
    %1281 = vmatmul.mubr.bf16.gmra.mrb[0].mxu0 %v714
    %v1282 = vpop.f32.mrb[0].mxu0
    %v1283 = vadd.f32 %v1026, %v1282
    %v1284 = vpop.f32.mrb[0].mxu0
    %v1285 = vpop.f32.mrb[0].mxu0
    %v1286 = vadd.f32 %v1029, %v1285
    %v1287 = vpop.f32.mrb[0].mxu0
    %1288 = vmatprep.mubr.bf16.mxu0 %v717
    %1289 = vmatmul.mubr.bf16.gmra.mrb[0].mxu0 %v716
    %v1290 = vpop.f32.mrb[0].mxu0
    %v1291 = vadd.f32 %v1034, %v1290
    %v1292 = vpop.f32.mrb[0].mxu0
    %v1293 = vpop.f32.mrb[0].mxu0
    %v1294 = vadd.f32 %v1037, %v1293
    %v1295 = vpop.f32.mrb[0].mxu0
    %1296 = vmatprep.mubr.bf16.mxu0 %v719
    %1297 = vmatmul.mubr.bf16.gmra.mrb[0].mxu0 %v718
    %v1298 = vpop.f32.mrb[0].mxu0
    %v1299 = vadd.f32 %v1042, %v1298
    %v1300 = vpop.f32.mrb[0].mxu0
    %v1301 = vpop.f32.mrb[0].mxu0
    %v1302 = vadd.f32 %v1045, %v1301
    %v1303 = vpop.f32.mrb[0].mxu0
    %1304 = vmatprep.mubr.bf16.mxu0 %v721
    %1305 = vmatmul.mubr.bf16.gmra.mrb[0].mxu0 %v720
    %v1306 = vpop.f32.mrb[0].mxu0
    %v1307 = vadd.f32 %v1050, %v1306
    %v1308 = vpop.f32.mrb[0].mxu0
    %v1309 = vpop.f32.mrb[0].mxu0
    %v1310 = vadd.f32 %v1053, %v1309
    %v1311 = vpop.f32.mrb[0].mxu0
    %1312 = vmatprep.mubr.bf16.mxu0 %v723
    %1313 = vmatmul.mubr.bf16.gmra.mrb[0].mxu0 %v722
    %v1314 = vpop.f32.mrb[0].mxu0
    %v1315 = vadd.f32 %v1058, %v1314
    %v1316 = vpop.f32.mrb[0].mxu0
    %v1317 = vpop.f32.mrb[0].mxu0
    %v1318 = vadd.f32 %v1061, %v1317
    %v1319 = vpop.f32.mrb[0].mxu0
    %1320 = vmatprep.mubr.bf16.mxu0 %v725
    %1321 = vmatmul.mubr.bf16.gmra.mrb[0].mxu0 %v724
    %v1322 = vpop.f32.mrb[0].mxu0
    %v1323 = vadd.f32 %v1066, %v1322
    %v1324 = vpop.f32.mrb[0].mxu0
    %v1325 = vpop.f32.mrb[0].mxu0
    %v1326 = vadd.f32 %v1069, %v1325
    %v1327 = vpop.f32.mrb[0].mxu0
    %1328 = vmatprep.mubr.bf16.mxu0 %v727
    %1329 = vmatmul.mubr.bf16.gmra.mrb[0].mxu0 %v726
    %v1330 = vpop.f32.mrb[0].mxu0
    %v1331 = vadd.f32 %v1074, %v1330
    %v1332 = vpop.f32.mrb[0].mxu0
    %v1333 = vpop.f32.mrb[0].mxu0
    %v1334 = vadd.f32 %v1077, %v1333
    %v1335 = vpop.f32.mrb[0].mxu0
    %1336 = vmatprep.mubr.bf16.mxu0 %v729
    %1337 = vmatmul.mubr.bf16.gmra.mrb[0].mxu0 %v728
    %v1338 = vpop.f32.mrb[0].mxu0
    %v1339 = vadd.f32 %v1082, %v1338
    %v1340 = vpop.f32.mrb[0].mxu0
    %v1341 = vpop.f32.mrb[0].mxu0
    %v1342 = vadd.f32 %v1085, %v1341
    %v1343 = vpop.f32.mrb[0].mxu0
    %1344 = vmatprep.mubr.bf16.mxu0 %v731
    %1345 = vmatmul.mubr.bf16.gmra.mrb[0].mxu0 %v730
    %v1346 = vpop.f32.mrb[0].mxu0
    %v1347 = vadd.f32 %v1090, %v1346
    %v1348 = vpop.f32.mrb[0].mxu0
    %v1349 = vpop.f32.mrb[0].mxu0
    %v1350 = vadd.f32 %v1093, %v1349
    %v1351 = vpop.f32.mrb[0].mxu0
    %1352 = vmatprep.mubr.bf16.mxu0 %v733
    %1353 = vmatmul.mubr.bf16.gmra.mrb[0].mxu0 %v732
    %v1354 = vpop.f32.mrb[0].mxu0
    %v1355 = vadd.f32 %v1098, %v1354
    %v1356 = vpop.f32.mrb[0].mxu0
    %v1357 = vpop.f32.mrb[0].mxu0
    %v1358 = vadd.f32 %v1101, %v1357
    %v1359 = vpop.f32.mrb[0].mxu0
    %1360 = vdwg.mxu0
    %v1361 = vld [vmem:[%s6] sm:$0x1]
    %v1363 = vlaneseq
    %v1364 = vshrl.u32 %v1363, 7
    %v1365 = vsub.s32 0, %v1364
    %v1366 = vrot.slane %v1361, %v1365
    %v1368 = vadd.f32 %v1235, %v1366
    %v1369 = vadd.f32 %v1238, %v1366
    %v1370 = vadd.f32 %v1243, %v1366
    %v1371 = vadd.f32 %v1246, %v1366
    %v1372 = vadd.f32 %v1251, %v1366
    %v1373 = vadd.f32 %v1254, %v1366
    %v1374 = vadd.f32 %v1259, %v1366
    %v1375 = vadd.f32 %v1262, %v1366
    %v1376 = vadd.f32 %v1267, %v1366
    %v1377 = vadd.f32 %v1270, %v1366
    %v1378 = vadd.f32 %v1275, %v1366
    %v1379 = vadd.f32 %v1278, %v1366
    %v1380 = vadd.f32 %v1283, %v1366
    %v1381 = vadd.f32 %v1286, %v1366
    %v1382 = vadd.f32 %v1291, %v1366
    %v1383 = vadd.f32 %v1294, %v1366
    %v1384 = vadd.f32 %v1299, %v1366
    %v1385 = vadd.f32 %v1302, %v1366
    %v1386 = vadd.f32 %v1307, %v1366
    %v1387 = vadd.f32 %v1310, %v1366
    %v1388 = vadd.f32 %v1315, %v1366
    %v1389 = vadd.f32 %v1318, %v1366
    %v1390 = vadd.f32 %v1323, %v1366
    %v1391 = vadd.f32 %v1326, %v1366
    %v1392 = vadd.f32 %v1331, %v1366
    %v1393 = vadd.f32 %v1334, %v1366
    %v1394 = vadd.f32 %v1339, %v1366
    %v1395 = vadd.f32 %v1342, %v1366
    %v1396 = vadd.f32 %v1347, %v1366
    %v1397 = vadd.f32 %v1350, %v1366
    %v1398 = vadd.f32 %v1355, %v1366
    %v1399 = vadd.f32 %v1358, %v1366
    %v1400 = vmax.f32 %v1368, 0.0
    %v1401 = vmax.f32 %v1369, 0.0
    %v1402 = vmax.f32 %v1370, 0.0
    %v1403 = vmax.f32 %v1371, 0.0
    %v1404 = vmax.f32 %v1372, 0.0
    %v1405 = vmax.f32 %v1373, 0.0
    %v1406 = vmax.f32 %v1374, 0.0
    %v1407 = vmax.f32 %v1375, 0.0
    %v1408 = vmax.f32 %v1376, 0.0
    %v1409 = vmax.f32 %v1377, 0.0
    %v1410 = vmax.f32 %v1378, 0.0
    %v1411 = vmax.f32 %v1379, 0.0
    %v1412 = vmax.f32 %v1380, 0.0
    %v1413 = vmax.f32 %v1381, 0.0
    %v1414 = vmax.f32 %v1382, 0.0
    %v1415 = vmax.f32 %v1383, 0.0
    %v1416 = vmax.f32 %v1384, 0.0
    %v1417 = vmax.f32 %v1385, 0.0
    %v1418 = vmax.f32 %v1386, 0.0
    %v1419 = vmax.f32 %v1387, 0.0
    %v1420 = vmax.f32 %v1388, 0.0
    %v1421 = vmax.f32 %v1389, 0.0
    %v1422 = vmax.f32 %v1390, 0.0
    %v1423 = vmax.f32 %v1391, 0.0
    %v1424 = vmax.f32 %v1392, 0.0
    %v1425 = vmax.f32 %v1393, 0.0
    %v1426 = vmax.f32 %v1394, 0.0
    %v1427 = vmax.f32 %v1395, 0.0
    %v1428 = vmax.f32 %v1396, 0.0
    %v1429 = vmax.f32 %v1397, 0.0
    %v1430 = vmax.f32 %v1398, 0.0
    %v1431 = vmax.f32 %v1399, 0.0
    %v1432 = vpack.c.bf16 %v1401, %v1400
    %v1433 = vpack.c.bf16 %v1403, %v1402
    %v1434 = vpack.c.bf16 %v1405, %v1404
    %v1435 = vpack.c.bf16 %v1407, %v1406
    %v1436 = vpack.c.bf16 %v1409, %v1408
    %v1437 = vpack.c.bf16 %v1411, %v1410
    %v1438 = vpack.c.bf16 %v1413, %v1412
    %v1439 = vpack.c.bf16 %v1415, %v1414
    %v1440 = vpack.c.bf16 %v1417, %v1416
    %v1441 = vpack.c.bf16 %v1419, %v1418
    %v1442 = vpack.c.bf16 %v1421, %v1420
    %v1443 = vpack.c.bf16 %v1423, %v1422
    %v1444 = vpack.c.bf16 %v1425, %v1424
    %v1445 = vpack.c.bf16 %v1427, %v1426
    %v1446 = vpack.c.bf16 %v1429, %v1428
    %v1447 = vpack.c.bf16 %v1431, %v1430
    %v1448 = vld [vmem:[%s7] sm:$0xff]
    %v1449 = vld [vmem:[%s7 + $0x8] sm:$0xff]
    %v1450 = vld [vmem:[%s7 + $0x10] sm:$0xff]
    %v1451 = vld [vmem:[%s7 + $0x18] sm:$0xff]
    %v1452 = vld [vmem:[%s7 + $0x20] sm:$0xff]
    %v1453 = vld [vmem:[%s7 + $0x28] sm:$0xff]
    %v1454 = vld [vmem:[%s7 + $0x30] sm:$0xff]
    %v1455 = vld [vmem:[%s7 + $0x38] sm:$0xff]
    %v1456 = vld [vmem:[%s7 + $0x40] sm:$0xff]
    %v1457 = vld [vmem:[%s7 + $0x48] sm:$0xff]
    %v1458 = vld [vmem:[%s7 + $0x50] sm:$0xff]
    %v1459 = vld [vmem:[%s7 + $0x58] sm:$0xff]
    %v1460 = vld [vmem:[%s7 + $0x60] sm:$0xff]
    %v1461 = vld [vmem:[%s7 + $0x68] sm:$0xff]
    %v1462 = vld [vmem:[%s7 + $0x70] sm:$0xff]
    %v1463 = vld [vmem:[%s7 + $0x78] sm:$0xff]
    %v1464 = vld [vmem:[%s8] sm:$0x3]
    %v1466 = vlaneseq
    %v1467 = vshrl.u32 %v1466, 7
    %v1468 = vsub.s32 0, %v1467
    %v1469 = vrot.slane %v1464, %v1468
    %v1470 = vlaneseq
    %v1471 = vshrl.u32 %v1470, 7
    %v1472 = vsub.s32 1, %v1471
    %v1473 = vrot.slane %v1464, %v1472
    %v1492 = vunpack.c.l.b16 %v1448
    %v1493 = vunpack.c.h.b16 %v1448
    %v1494 = vunpack.c.l.b16 %v1449
    %v1495 = vunpack.c.h.b16 %v1449
    %v1496 = vunpack.c.l.b16 %v1450
    %v1497 = vunpack.c.h.b16 %v1450
    %v1498 = vunpack.c.l.b16 %v1451
    %v1499 = vunpack.c.h.b16 %v1451
    %v1500 = vunpack.c.l.b16 %v1452
    %v1501 = vunpack.c.h.b16 %v1452
    %v1502 = vunpack.c.l.b16 %v1453
    %v1503 = vunpack.c.h.b16 %v1453
    %v1504 = vunpack.c.l.b16 %v1454
    %v1505 = vunpack.c.h.b16 %v1454
    %v1506 = vunpack.c.l.b16 %v1455
    %v1507 = vunpack.c.h.b16 %v1455
    %v1508 = vunpack.c.l.b16 %v1456
    %v1509 = vunpack.c.h.b16 %v1456
    %v1510 = vunpack.c.l.b16 %v1457
    %v1511 = vunpack.c.h.b16 %v1457
    %v1512 = vunpack.c.l.b16 %v1458
    %v1513 = vunpack.c.h.b16 %v1458
    %v1514 = vunpack.c.l.b16 %v1459
    %v1515 = vunpack.c.h.b16 %v1459
    %v1516 = vunpack.c.l.b16 %v1460
    %v1517 = vunpack.c.h.b16 %v1460
    %v1518 = vunpack.c.l.b16 %v1461
    %v1519 = vunpack.c.h.b16 %v1461
    %v1520 = vunpack.c.l.b16 %v1462
    %v1521 = vunpack.c.h.b16 %v1462
    %v1522 = vunpack.c.l.b16 %v1463
    %v1523 = vunpack.c.h.b16 %v1463
    %v1524 = vpack.c.b16 %v1494, %v1492
    %v1525 = vpack.c.b16 %v1495, %v1493
    %v1526 = vpack.c.b16 %v1498, %v1496
    %v1527 = vpack.c.b16 %v1499, %v1497
    %v1528 = vpack.c.b16 %v1502, %v1500
    %v1529 = vpack.c.b16 %v1503, %v1501
    %v1530 = vpack.c.b16 %v1506, %v1504
    %v1531 = vpack.c.b16 %v1507, %v1505
    %v1532 = vpack.c.b16 %v1510, %v1508
    %v1533 = vpack.c.b16 %v1511, %v1509
    %v1534 = vpack.c.b16 %v1514, %v1512
    %v1535 = vpack.c.b16 %v1515, %v1513
    %v1536 = vpack.c.b16 %v1518, %v1516
    %v1537 = vpack.c.b16 %v1519, %v1517
    %v1538 = vpack.c.b16 %v1522, %v1520
    %v1539 = vpack.c.b16 %v1523, %v1521
    %1556 = vmatprep.subr.bf16.mxu0 %v1525
    %1557 = vmatpush1.bf16.msra.mxu0 %v1524
    %1558 = vmatprep.subr.bf16.mxu0 %v1527
    %1559 = vmatpush1.bf16.msra.mxu0 %v1526
    %1560 = vmatprep.subr.bf16.mxu0 %v1529
    %1561 = vmatpush1.bf16.msra.mxu0 %v1528
    %1562 = vmatprep.subr.bf16.mxu0 %v1531
    %1563 = vmatpush1.bf16.msra.mxu0 %v1530
    %1564 = vmatprep.subr.bf16.mxu0 %v1533
    %1565 = vmatpush1.bf16.msra.mxu0 %v1532
    %1566 = vmatprep.subr.bf16.mxu0 %v1535
    %1567 = vmatpush1.bf16.msra.mxu0 %v1534
    %1568 = vmatprep.subr.bf16.mxu0 %v1537
    %1569 = vmatpush1.bf16.msra.mxu0 %v1536
    %1570 = vmatprep.subr.bf16.mxu0 %v1539
    %1571 = vmatpush1.bf16.msra.mxu0 %v1538
    %1572 = vmatprep.subr.bf16.mxu0 0
    %1573 = vmatpush1.bf16.msra.mxu0 0
    %1574 = vmatprep.subr.bf16.mxu0 0
    %1575 = vmatpush1.bf16.msra.mxu0 0
    %1576 = vmatprep.subr.bf16.mxu0 0
    %1577 = vmatpush1.bf16.msra.mxu0 0
    %1578 = vmatprep.subr.bf16.mxu0 0
    %1579 = vmatpush1.bf16.msra.mxu0 0
    %1580 = vmatprep.subr.bf16.mxu0 0
    %1581 = vmatpush1.bf16.msra.mxu0 0
    %1582 = vmatprep.subr.bf16.mxu0 0
    %1583 = vmatpush1.bf16.msra.mxu0 0
    %1584 = vmatprep.subr.bf16.mxu0 0
    %1585 = vmatpush1.bf16.msra.mxu0 0
    %1586 = vmatprep.subr.bf16.mxu0 0
    %1587 = vmatpush1.bf16.msra.mxu0 0
    %1588 = vmatprep.mubr.bf16.mxu0 0
    %1589 = vmatmul.mubr.bf16.gmra.mrb[0].mxu0 %v1432
    %v1590 = vpop.f32.mrb[0].mxu0
    %v1591 = vadd.f32 %v1469, %v1590
    %v1592 = vpop.f32.mrb[0].mxu0
    %v1593 = vadd.f32 %v1473, %v1592
    %v1594 = vpop.f32.mrb[0].mxu0
    %v1595 = vadd.f32 %v1469, %v1594
    %v1596 = vpop.f32.mrb[0].mxu0
    %v1597 = vadd.f32 %v1473, %v1596
    %1598 = vmatprep.mubr.bf16.mxu0 0
    %1599 = vmatmul.mubr.bf16.gmra.mrb[0].mxu0 %v1433
    %v1600 = vpop.f32.mrb[0].mxu0
    %v1601 = vadd.f32 %v1469, %v1600
    %v1602 = vpop.f32.mrb[0].mxu0
    %v1603 = vadd.f32 %v1473, %v1602
    %v1604 = vpop.f32.mrb[0].mxu0
    %v1605 = vadd.f32 %v1469, %v1604
    %v1606 = vpop.f32.mrb[0].mxu0
    %v1607 = vadd.f32 %v1473, %v1606
    %1608 = vmatprep.mubr.bf16.mxu0 0
    %1609 = vmatmul.mubr.bf16.gmra.mrb[0].mxu0 %v1434
    %v1610 = vpop.f32.mrb[0].mxu0
    %v1611 = vadd.f32 %v1469, %v1610
    %v1612 = vpop.f32.mrb[0].mxu0
    %v1613 = vadd.f32 %v1473, %v1612
    %v1614 = vpop.f32.mrb[0].mxu0
    %v1615 = vadd.f32 %v1469, %v1614
    %v1616 = vpop.f32.mrb[0].mxu0
    %v1617 = vadd.f32 %v1473, %v1616
    %1618 = vmatprep.mubr.bf16.mxu0 0
    %1619 = vmatmul.mubr.bf16.gmra.mrb[0].mxu0 %v1435
    %v1620 = vpop.f32.mrb[0].mxu0
    %v1621 = vadd.f32 %v1469, %v1620
    %v1622 = vpop.f32.mrb[0].mxu0
    %v1623 = vadd.f32 %v1473, %v1622
    %v1624 = vpop.f32.mrb[0].mxu0
    %v1625 = vadd.f32 %v1469, %v1624
    %v1626 = vpop.f32.mrb[0].mxu0
    %v1627 = vadd.f32 %v1473, %v1626
    %1628 = vmatprep.mubr.bf16.mxu0 0
    %1629 = vmatmul.mubr.bf16.gmra.mrb[0].mxu0 %v1436
    %v1630 = vpop.f32.mrb[0].mxu0
    %v1631 = vadd.f32 %v1469, %v1630
    %v1632 = vpop.f32.mrb[0].mxu0
    %v1633 = vadd.f32 %v1473, %v1632
    %v1634 = vpop.f32.mrb[0].mxu0
    %v1635 = vadd.f32 %v1469, %v1634
    %v1636 = vpop.f32.mrb[0].mxu0
    %v1637 = vadd.f32 %v1473, %v1636
    %1638 = vmatprep.mubr.bf16.mxu0 0
    %1639 = vmatmul.mubr.bf16.gmra.mrb[0].mxu0 %v1437
    %v1640 = vpop.f32.mrb[0].mxu0
    %v1641 = vadd.f32 %v1469, %v1640
    %v1642 = vpop.f32.mrb[0].mxu0
    %v1643 = vadd.f32 %v1473, %v1642
    %v1644 = vpop.f32.mrb[0].mxu0
    %v1645 = vadd.f32 %v1469, %v1644
    %v1646 = vpop.f32.mrb[0].mxu0
    %v1647 = vadd.f32 %v1473, %v1646
    %1648 = vmatprep.mubr.bf16.mxu0 0
    %1649 = vmatmul.mubr.bf16.gmra.mrb[0].mxu0 %v1438
    %v1650 = vpop.f32.mrb[0].mxu0
    %v1651 = vadd.f32 %v1469, %v1650
    %v1652 = vpop.f32.mrb[0].mxu0
    %v1653 = vadd.f32 %v1473, %v1652
    %v1654 = vpop.f32.mrb[0].mxu0
    %v1655 = vadd.f32 %v1469, %v1654
    %v1656 = vpop.f32.mrb[0].mxu0
    %v1657 = vadd.f32 %v1473, %v1656
    %1658 = vmatprep.mubr.bf16.mxu0 0
    %1659 = vmatmul.mubr.bf16.gmra.mrb[0].mxu0 %v1439
    %v1660 = vpop.f32.mrb[0].mxu0
    %v1661 = vadd.f32 %v1469, %v1660
    %v1662 = vpop.f32.mrb[0].mxu0
    %v1663 = vadd.f32 %v1473, %v1662
    %v1664 = vpop.f32.mrb[0].mxu0
    %v1665 = vadd.f32 %v1469, %v1664
    %v1666 = vpop.f32.mrb[0].mxu0
    %v1667 = vadd.f32 %v1473, %v1666
    %1668 = vmatprep.mubr.bf16.mxu0 0
    %1669 = vmatmul.mubr.bf16.gmra.mrb[0].mxu0 %v1440
    %v1670 = vpop.f32.mrb[0].mxu0
    %v1671 = vadd.f32 %v1469, %v1670
    %v1672 = vpop.f32.mrb[0].mxu0
    %v1673 = vadd.f32 %v1473, %v1672
    %v1674 = vpop.f32.mrb[0].mxu0
    %v1675 = vadd.f32 %v1469, %v1674
    %v1676 = vpop.f32.mrb[0].mxu0
    %v1677 = vadd.f32 %v1473, %v1676
    %1678 = vmatprep.mubr.bf16.mxu0 0
    %1679 = vmatmul.mubr.bf16.gmra.mrb[0].mxu0 %v1441
    %v1680 = vpop.f32.mrb[0].mxu0
    %v1681 = vadd.f32 %v1469, %v1680
    %v1682 = vpop.f32.mrb[0].mxu0
    %v1683 = vadd.f32 %v1473, %v1682
    %v1684 = vpop.f32.mrb[0].mxu0
    %v1685 = vadd.f32 %v1469, %v1684
    %v1686 = vpop.f32.mrb[0].mxu0
    %v1687 = vadd.f32 %v1473, %v1686
    %1688 = vmatprep.mubr.bf16.mxu0 0
    %1689 = vmatmul.mubr.bf16.gmra.mrb[0].mxu0 %v1442
    %v1690 = vpop.f32.mrb[0].mxu0
    %v1691 = vadd.f32 %v1469, %v1690
    %v1692 = vpop.f32.mrb[0].mxu0
    %v1693 = vadd.f32 %v1473, %v1692
    %v1694 = vpop.f32.mrb[0].mxu0
    %v1695 = vadd.f32 %v1469, %v1694
    %v1696 = vpop.f32.mrb[0].mxu0
    %v1697 = vadd.f32 %v1473, %v1696
    %1698 = vmatprep.mubr.bf16.mxu0 0
    %1699 = vmatmul.mubr.bf16.gmra.mrb[0].mxu0 %v1443
    %v1700 = vpop.f32.mrb[0].mxu0
    %v1701 = vadd.f32 %v1469, %v1700
    %v1702 = vpop.f32.mrb[0].mxu0
    %v1703 = vadd.f32 %v1473, %v1702
    %v1704 = vpop.f32.mrb[0].mxu0
    %v1705 = vadd.f32 %v1469, %v1704
    %v1706 = vpop.f32.mrb[0].mxu0
    %v1707 = vadd.f32 %v1473, %v1706
    %1708 = vmatprep.mubr.bf16.mxu0 0
    %1709 = vmatmul.mubr.bf16.gmra.mrb[0].mxu0 %v1444
    %v1710 = vpop.f32.mrb[0].mxu0
    %v1711 = vadd.f32 %v1469, %v1710
    %v1712 = vpop.f32.mrb[0].mxu0
    %v1713 = vadd.f32 %v1473, %v1712
    %v1714 = vpop.f32.mrb[0].mxu0
    %v1715 = vadd.f32 %v1469, %v1714
    %v1716 = vpop.f32.mrb[0].mxu0
    %v1717 = vadd.f32 %v1473, %v1716
    %1718 = vmatprep.mubr.bf16.mxu0 0
    %1719 = vmatmul.mubr.bf16.gmra.mrb[0].mxu0 %v1445
    %v1720 = vpop.f32.mrb[0].mxu0
    %v1721 = vadd.f32 %v1469, %v1720
    %v1722 = vpop.f32.mrb[0].mxu0
    %v1723 = vadd.f32 %v1473, %v1722
    %v1724 = vpop.f32.mrb[0].mxu0
    %v1725 = vadd.f32 %v1469, %v1724
    %v1726 = vpop.f32.mrb[0].mxu0
    %v1727 = vadd.f32 %v1473, %v1726
    %1728 = vmatprep.mubr.bf16.mxu0 0
    %1729 = vmatmul.mubr.bf16.gmra.mrb[0].mxu0 %v1446
    %v1730 = vpop.f32.mrb[0].mxu0
    %v1731 = vadd.f32 %v1469, %v1730
    %v1732 = vpop.f32.mrb[0].mxu0
    %v1733 = vadd.f32 %v1473, %v1732
    %v1734 = vpop.f32.mrb[0].mxu0
    %v1735 = vadd.f32 %v1469, %v1734
    %v1736 = vpop.f32.mrb[0].mxu0
    %v1737 = vadd.f32 %v1473, %v1736
    %1738 = vmatprep.mubr.bf16.mxu0 0
    %1739 = vmatmul.mubr.bf16.gmra.mrb[0].mxu0 %v1447
    %v1740 = vpop.f32.mrb[0].mxu0
    %v1741 = vadd.f32 %v1469, %v1740
    %v1742 = vpop.f32.mrb[0].mxu0
    %v1743 = vadd.f32 %v1473, %v1742
    %v1744 = vpop.f32.mrb[0].mxu0
    %v1745 = vadd.f32 %v1469, %v1744
    %v1746 = vpop.f32.mrb[0].mxu0
    %v1747 = vadd.f32 %v1473, %v1746
    %1748 = vdwg.mxu0
    %v1749 = vsub.f32 %v1591, %v94
    %v1750 = vsub.f32 %v1593, %v95
    %v1751 = vsub.f32 %v1595, %v96
    %v1752 = vsub.f32 %v1597, %v97
    %v1753 = vsub.f32 %v1601, %v98
    %v1754 = vsub.f32 %v1603, %v99
    %v1755 = vsub.f32 %v1605, %v100
    %v1756 = vsub.f32 %v1607, %v101
    %v1757 = vsub.f32 %v1611, %v102
    %v1758 = vsub.f32 %v1613, %v103
    %v1759 = vsub.f32 %v1615, %v104
    %v1760 = vsub.f32 %v1617, %v105
    %v1761 = vsub.f32 %v1621, %v106
    %v1762 = vsub.f32 %v1623, %v107
    %v1763 = vsub.f32 %v1625, %v108
    %v1764 = vsub.f32 %v1627, %v109
    %v1765 = vsub.f32 %v1631, %v110
    %v1766 = vsub.f32 %v1633, %v111
    %v1767 = vsub.f32 %v1635, %v112
    %v1768 = vsub.f32 %v1637, %v113
    %v1769 = vsub.f32 %v1641, %v114
    %v1770 = vsub.f32 %v1643, %v115
    %v1771 = vsub.f32 %v1645, %v116
    %v1772 = vsub.f32 %v1647, %v117
    %v1773 = vsub.f32 %v1651, %v118
    %v1774 = vsub.f32 %v1653, %v119
    %v1775 = vsub.f32 %v1655, %v120
    %v1776 = vsub.f32 %v1657, %v121
    %v1777 = vsub.f32 %v1661, %v122
    %v1778 = vsub.f32 %v1663, %v123
    %v1779 = vsub.f32 %v1665, %v124
    %v1780 = vsub.f32 %v1667, %v125
    %v1781 = vsub.f32 %v1671, %v126
    %v1782 = vsub.f32 %v1673, %v127
    %v1783 = vsub.f32 %v1675, %v128
    %v1784 = vsub.f32 %v1677, %v129
    %v1785 = vsub.f32 %v1681, %v130
    %v1786 = vsub.f32 %v1683, %v131
    %v1787 = vsub.f32 %v1685, %v132
    %v1788 = vsub.f32 %v1687, %v133
    %v1789 = vsub.f32 %v1691, %v134
    %v1790 = vsub.f32 %v1693, %v135
    %v1791 = vsub.f32 %v1695, %v136
    %v1792 = vsub.f32 %v1697, %v137
    %v1793 = vsub.f32 %v1701, %v138
    %v1794 = vsub.f32 %v1703, %v139
    %v1795 = vsub.f32 %v1705, %v140
    %v1796 = vsub.f32 %v1707, %v141
    %v1797 = vsub.f32 %v1711, %v142
    %v1798 = vsub.f32 %v1713, %v143
    %v1799 = vsub.f32 %v1715, %v144
    %v1800 = vsub.f32 %v1717, %v145
    %v1801 = vsub.f32 %v1721, %v146
    %v1802 = vsub.f32 %v1723, %v147
    %v1803 = vsub.f32 %v1725, %v148
    %v1804 = vsub.f32 %v1727, %v149
    %v1805 = vsub.f32 %v1731, %v150
    %v1806 = vsub.f32 %v1733, %v151
    %v1807 = vsub.f32 %v1735, %v152
    %v1808 = vsub.f32 %v1737, %v153
    %v1809 = vsub.f32 %v1741, %v154
    %v1810 = vsub.f32 %v1743, %v155
    %v1811 = vsub.f32 %v1745, %v156
    %v1812 = vsub.f32 %v1747, %v157
    %v1813 = vand.u32 2147483647, %v1749
    %v1814 = vand.u32 2147483647, %v1750
    %v1815 = vand.u32 2147483647, %v1751
    %v1816 = vand.u32 2147483647, %v1752
    %v1817 = vand.u32 2147483647, %v1753
    %v1818 = vand.u32 2147483647, %v1754
    %v1819 = vand.u32 2147483647, %v1755
    %v1820 = vand.u32 2147483647, %v1756
    %v1821 = vand.u32 2147483647, %v1757
    %v1822 = vand.u32 2147483647, %v1758
    %v1823 = vand.u32 2147483647, %v1759
    %v1824 = vand.u32 2147483647, %v1760
    %v1825 = vand.u32 2147483647, %v1761
    %v1826 = vand.u32 2147483647, %v1762
    %v1827 = vand.u32 2147483647, %v1763
    %v1828 = vand.u32 2147483647, %v1764
    %v1829 = vand.u32 2147483647, %v1765
    %v1830 = vand.u32 2147483647, %v1766
    %v1831 = vand.u32 2147483647, %v1767
    %v1832 = vand.u32 2147483647, %v1768
    %v1833 = vand.u32 2147483647, %v1769
    %v1834 = vand.u32 2147483647, %v1770
    %v1835 = vand.u32 2147483647, %v1771
    %v1836 = vand.u32 2147483647, %v1772
    %v1837 = vand.u32 2147483647, %v1773
    %v1838 = vand.u32 2147483647, %v1774
    %v1839 = vand.u32 2147483647, %v1775
    %v1840 = vand.u32 2147483647, %v1776
    %v1841 = vand.u32 2147483647, %v1777
    %v1842 = vand.u32 2147483647, %v1778
    %v1843 = vand.u32 2147483647, %v1779
    %v1844 = vand.u32 2147483647, %v1780
    %v1845 = vand.u32 2147483647, %v1781
    %v1846 = vand.u32 2147483647, %v1782
    %v1847 = vand.u32 2147483647, %v1783
    %v1848 = vand.u32 2147483647, %v1784
    %v1849 = vand.u32 2147483647, %v1785
    %v1850 = vand.u32 2147483647, %v1786
    %v1851 = vand.u32 2147483647, %v1787
    %v1852 = vand.u32 2147483647, %v1788
    %v1853 = vand.u32 2147483647, %v1789
    %v1854 = vand.u32 2147483647, %v1790
    %v1855 = vand.u32 2147483647, %v1791
    %v1856 = vand.u32 2147483647, %v1792
    %v1857 = vand.u32 2147483647, %v1793
    %v1858 = vand.u32 2147483647, %v1794
    %v1859 = vand.u32 2147483647, %v1795
    %v1860 = vand.u32 2147483647, %v1796
    %v1861 = vand.u32 2147483647, %v1797
    %v1862 = vand.u32 2147483647, %v1798
    %v1863 = vand.u32 2147483647, %v1799
    %v1864 = vand.u32 2147483647, %v1800
    %v1865 = vand.u32 2147483647, %v1801
    %v1866 = vand.u32 2147483647, %v1802
    %v1867 = vand.u32 2147483647, %v1803
    %v1868 = vand.u32 2147483647, %v1804
    %v1869 = vand.u32 2147483647, %v1805
    %v1870 = vand.u32 2147483647, %v1806
    %v1871 = vand.u32 2147483647, %v1807
    %v1872 = vand.u32 2147483647, %v1808
    %v1873 = vand.u32 2147483647, %v1809
    %v1874 = vand.u32 2147483647, %v1810
    %v1875 = vand.u32 2147483647, %v1811
    %v1876 = vand.u32 2147483647, %v1812
    %v1877 = vadd.f32 %v1813, %v1814
    %1878 = vadd.xlane.f32.xlu0 %v1877
    %v1879 = vpop.xlane.xlu0 %1878
    %v1880 = vadd.f32 %v1815, %v1816
    %1881 = vadd.xlane.f32.xlu0 %v1880
    %v1882 = vpop.xlane.xlu0 %1881
    %v1883 = vadd.f32 %v1817, %v1818
    %1884 = vadd.xlane.f32.xlu0 %v1883
    %v1885 = vpop.xlane.xlu0 %1884
    %v1886 = vadd.f32 %v1819, %v1820
    %1887 = vadd.xlane.f32.xlu0 %v1886
    %v1888 = vpop.xlane.xlu0 %1887
    %v1889 = vadd.f32 %v1821, %v1822
    %1890 = vadd.xlane.f32.xlu0 %v1889
    %v1891 = vpop.xlane.xlu0 %1890
    %v1892 = vadd.f32 %v1823, %v1824
    %1893 = vadd.xlane.f32.xlu0 %v1892
    %v1894 = vpop.xlane.xlu0 %1893
    %v1895 = vadd.f32 %v1825, %v1826
    %1896 = vadd.xlane.f32.xlu0 %v1895
    %v1897 = vpop.xlane.xlu0 %1896
    %v1898 = vadd.f32 %v1827, %v1828
    %1899 = vadd.xlane.f32.xlu0 %v1898
    %v1900 = vpop.xlane.xlu0 %1899
    %v1901 = vadd.f32 %v1829, %v1830
    %1902 = vadd.xlane.f32.xlu0 %v1901
    %v1903 = vpop.xlane.xlu0 %1902
    %v1904 = vadd.f32 %v1831, %v1832
    %1905 = vadd.xlane.f32.xlu0 %v1904
    %v1906 = vpop.xlane.xlu0 %1905
    %v1907 = vadd.f32 %v1833, %v1834
    %1908 = vadd.xlane.f32.xlu0 %v1907
    %v1909 = vpop.xlane.xlu0 %1908
    %v1910 = vadd.f32 %v1835, %v1836
    %1911 = vadd.xlane.f32.xlu0 %v1910
    %v1912 = vpop.xlane.xlu0 %1911
    %v1913 = vadd.f32 %v1837, %v1838
    %1914 = vadd.xlane.f32.xlu0 %v1913
    %v1915 = vpop.xlane.xlu0 %1914
    %v1916 = vadd.f32 %v1839, %v1840
    %1917 = vadd.xlane.f32.xlu0 %v1916
    %v1918 = vpop.xlane.xlu0 %1917
    %v1919 = vadd.f32 %v1841, %v1842
    %1920 = vadd.xlane.f32.xlu0 %v1919
    %v1921 = vpop.xlane.xlu0 %1920
    %v1922 = vadd.f32 %v1843, %v1844
    %1923 = vadd.xlane.f32.xlu0 %v1922
    %v1924 = vpop.xlane.xlu0 %1923
    %v1925 = vadd.f32 %v1845, %v1846
    %1926 = vadd.xlane.f32.xlu0 %v1925
    %v1927 = vpop.xlane.xlu0 %1926
    %v1928 = vadd.f32 %v1847, %v1848
    %1929 = vadd.xlane.f32.xlu0 %v1928
    %v1930 = vpop.xlane.xlu0 %1929
    %v1931 = vadd.f32 %v1849, %v1850
    %1932 = vadd.xlane.f32.xlu0 %v1931
    %v1933 = vpop.xlane.xlu0 %1932
    %v1934 = vadd.f32 %v1851, %v1852
    %1935 = vadd.xlane.f32.xlu0 %v1934
    %v1936 = vpop.xlane.xlu0 %1935
    %v1937 = vadd.f32 %v1853, %v1854
    %1938 = vadd.xlane.f32.xlu0 %v1937
    %v1939 = vpop.xlane.xlu0 %1938
    %v1940 = vadd.f32 %v1855, %v1856
    %1941 = vadd.xlane.f32.xlu0 %v1940
    %v1942 = vpop.xlane.xlu0 %1941
    %v1943 = vadd.f32 %v1857, %v1858
    %1944 = vadd.xlane.f32.xlu0 %v1943
    %v1945 = vpop.xlane.xlu0 %1944
    %v1946 = vadd.f32 %v1859, %v1860
    %1947 = vadd.xlane.f32.xlu0 %v1946
    %v1948 = vpop.xlane.xlu0 %1947
    %v1949 = vadd.f32 %v1861, %v1862
    %1950 = vadd.xlane.f32.xlu0 %v1949
    %v1951 = vpop.xlane.xlu0 %1950
    %v1952 = vadd.f32 %v1863, %v1864
    %1953 = vadd.xlane.f32.xlu0 %v1952
    %v1954 = vpop.xlane.xlu0 %1953
    %v1955 = vadd.f32 %v1865, %v1866
    %1956 = vadd.xlane.f32.xlu0 %v1955
    %v1957 = vpop.xlane.xlu0 %1956
    %v1958 = vadd.f32 %v1867, %v1868
    %1959 = vadd.xlane.f32.xlu0 %v1958
    %v1960 = vpop.xlane.xlu0 %1959
    %v1961 = vadd.f32 %v1869, %v1870
    %1962 = vadd.xlane.f32.xlu0 %v1961
    %v1963 = vpop.xlane.xlu0 %1962
    %v1964 = vadd.f32 %v1871, %v1872
    %1965 = vadd.xlane.f32.xlu0 %v1964
    %v1966 = vpop.xlane.xlu0 %1965
    %v1967 = vadd.f32 %v1873, %v1874
    %1968 = vadd.xlane.f32.xlu0 %v1967
    %v1969 = vpop.xlane.xlu0 %1968
    %v1970 = vadd.f32 %v1875, %v1876
    %1971 = vadd.xlane.f32.xlu0 %v1970
    %v1972 = vpop.xlane.xlu0 %1971
    %v1973 = vmul.f32 %v1879, %v62
    %v1974 = vmul.f32 %v1882, %v63
    %v1975 = vmul.f32 %v1885, %v64
    %v1976 = vmul.f32 %v1888, %v65
    %v1977 = vmul.f32 %v1891, %v66
    %v1978 = vmul.f32 %v1894, %v67
    %v1979 = vmul.f32 %v1897, %v68
    %v1980 = vmul.f32 %v1900, %v69
    %v1981 = vmul.f32 %v1903, %v70
    %v1982 = vmul.f32 %v1906, %v71
    %v1983 = vmul.f32 %v1909, %v72
    %v1984 = vmul.f32 %v1912, %v73
    %v1985 = vmul.f32 %v1915, %v74
    %v1986 = vmul.f32 %v1918, %v75
    %v1987 = vmul.f32 %v1921, %v76
    %v1988 = vmul.f32 %v1924, %v77
    %v1989 = vmul.f32 %v1927, %v78
    %v1990 = vmul.f32 %v1930, %v79
    %v1991 = vmul.f32 %v1933, %v80
    %v1992 = vmul.f32 %v1936, %v81
    %v1993 = vmul.f32 %v1939, %v82
    %v1994 = vmul.f32 %v1942, %v83
    %v1995 = vmul.f32 %v1945, %v84
    %v1996 = vmul.f32 %v1948, %v85
    %v1997 = vmul.f32 %v1951, %v86
    %v1998 = vmul.f32 %v1954, %v87
    %v1999 = vmul.f32 %v1957, %v88
    %v2000 = vmul.f32 %v1960, %v89
    %v2001 = vmul.f32 %v1963, %v90
    %v2002 = vmul.f32 %v1966, %v91
    %v2003 = vmul.f32 %v1969, %v92
    %v2004 = vmul.f32 %v1972, %v93
    %2037 = vrot.lane.b32.xlu0 %v1973, 126
    %v2038 = vpop.permute.xlu0 %2037
    %2039 = vrot.lane.b32.xlu0 %v1974, 126
    %v2040 = vpop.permute.xlu0 %2039
    %2041 = vrot.lane.b32.xlu0 %v1975, 126
    %v2042 = vpop.permute.xlu0 %2041
    %2043 = vrot.lane.b32.xlu0 %v1976, 126
    %v2044 = vpop.permute.xlu0 %2043
    %2045 = vrot.lane.b32.xlu0 %v1977, 126
    %v2046 = vpop.permute.xlu0 %2045
    %2047 = vrot.lane.b32.xlu0 %v1978, 126
    %v2048 = vpop.permute.xlu0 %2047
    %2049 = vrot.lane.b32.xlu0 %v1979, 126
    %v2050 = vpop.permute.xlu0 %2049
    %2051 = vrot.lane.b32.xlu0 %v1980, 126
    %v2052 = vpop.permute.xlu0 %2051
    %2053 = vrot.lane.b32.xlu0 %v1981, 126
    %v2054 = vpop.permute.xlu0 %2053
    %2055 = vrot.lane.b32.xlu0 %v1982, 126
    %v2056 = vpop.permute.xlu0 %2055
    %2057 = vrot.lane.b32.xlu0 %v1983, 126
    %v2058 = vpop.permute.xlu0 %2057
    %2059 = vrot.lane.b32.xlu0 %v1984, 126
    %v2060 = vpop.permute.xlu0 %2059
    %2061 = vrot.lane.b32.xlu0 %v1985, 126
    %v2062 = vpop.permute.xlu0 %2061
    %2063 = vrot.lane.b32.xlu0 %v1986, 126
    %v2064 = vpop.permute.xlu0 %2063
    %2065 = vrot.lane.b32.xlu0 %v1987, 126
    %v2066 = vpop.permute.xlu0 %2065
    %2067 = vrot.lane.b32.xlu0 %v1988, 126
    %v2068 = vpop.permute.xlu0 %2067
    %2069 = vrot.lane.b32.xlu0 %v1989, 126
    %v2070 = vpop.permute.xlu0 %2069
    %2071 = vrot.lane.b32.xlu0 %v1990, 126
    %v2072 = vpop.permute.xlu0 %2071
    %2073 = vrot.lane.b32.xlu0 %v1991, 126
    %v2074 = vpop.permute.xlu0 %2073
    %2075 = vrot.lane.b32.xlu0 %v1992, 126
    %v2076 = vpop.permute.xlu0 %2075
    %2077 = vrot.lane.b32.xlu0 %v1993, 126
    %v2078 = vpop.permute.xlu0 %2077
    %2079 = vrot.lane.b32.xlu0 %v1994, 126
    %v2080 = vpop.permute.xlu0 %2079
    %2081 = vrot.lane.b32.xlu0 %v1995, 126
    %v2082 = vpop.permute.xlu0 %2081
    %2083 = vrot.lane.b32.xlu0 %v1996, 126
    %v2084 = vpop.permute.xlu0 %2083
    %2085 = vrot.lane.b32.xlu0 %v1997, 126
    %v2086 = vpop.permute.xlu0 %2085
    %2087 = vrot.lane.b32.xlu0 %v1998, 126
    %v2088 = vpop.permute.xlu0 %2087
    %2089 = vrot.lane.b32.xlu0 %v1999, 126
    %v2090 = vpop.permute.xlu0 %2089
    %2091 = vrot.lane.b32.xlu0 %v2000, 126
    %v2092 = vpop.permute.xlu0 %2091
    %2093 = vrot.lane.b32.xlu0 %v2001, 126
    %v2094 = vpop.permute.xlu0 %2093
    %2095 = vrot.lane.b32.xlu0 %v2002, 126
    %v2096 = vpop.permute.xlu0 %2095
    %2097 = vrot.lane.b32.xlu0 %v2003, 126
    %v2098 = vpop.permute.xlu0 %2097
    %2099 = vrot.lane.b32.xlu0 %v2004, 126
    %v2100 = vpop.permute.xlu0 %2099
    %vm2133 = vcmask 7168
    %v2134 = vsel %vm2133, %v2038, 0.0
    %v2135 = vsel %vm2133, %v2040, 0.0
    %v2136 = vadd.f32 %v2134, %v2135
    %v2137 = vsel %vm2133, %v2042, 0.0
    %v2138 = vadd.f32 %v2136, %v2137
    %v2139 = vsel %vm2133, %v2044, 0.0
    %v2140 = vadd.f32 %v2138, %v2139
    %v2141 = vsel %vm2133, %v2046, 0.0
    %v2142 = vadd.f32 %v2140, %v2141
    %v2143 = vsel %vm2133, %v2048, 0.0
    %v2144 = vadd.f32 %v2142, %v2143
    %v2145 = vsel %vm2133, %v2050, 0.0
    %v2146 = vadd.f32 %v2144, %v2145
    %v2147 = vsel %vm2133, %v2052, 0.0
    %v2148 = vadd.f32 %v2146, %v2147
    %v2149 = vsel %vm2133, %v2054, 0.0
    %v2150 = vadd.f32 %v2148, %v2149
    %v2151 = vsel %vm2133, %v2056, 0.0
    %v2152 = vadd.f32 %v2150, %v2151
    %v2153 = vsel %vm2133, %v2058, 0.0
    %v2154 = vadd.f32 %v2152, %v2153
    %v2155 = vsel %vm2133, %v2060, 0.0
    %v2156 = vadd.f32 %v2154, %v2155
    %v2157 = vsel %vm2133, %v2062, 0.0
    %v2158 = vadd.f32 %v2156, %v2157
    %v2159 = vsel %vm2133, %v2064, 0.0
    %v2160 = vadd.f32 %v2158, %v2159
    %v2161 = vsel %vm2133, %v2066, 0.0
    %v2162 = vadd.f32 %v2160, %v2161
    %v2163 = vsel %vm2133, %v2068, 0.0
    %v2164 = vadd.f32 %v2162, %v2163
    %v2165 = vsel %vm2133, %v2070, 0.0
    %v2166 = vadd.f32 %v2164, %v2165
    %v2167 = vsel %vm2133, %v2072, 0.0
    %v2168 = vadd.f32 %v2166, %v2167
    %v2169 = vsel %vm2133, %v2074, 0.0
    %v2170 = vadd.f32 %v2168, %v2169
    %v2171 = vsel %vm2133, %v2076, 0.0
    %v2172 = vadd.f32 %v2170, %v2171
    %v2173 = vsel %vm2133, %v2078, 0.0
    %v2174 = vadd.f32 %v2172, %v2173
    %v2175 = vsel %vm2133, %v2080, 0.0
    %v2176 = vadd.f32 %v2174, %v2175
    %v2177 = vsel %vm2133, %v2082, 0.0
    %v2178 = vadd.f32 %v2176, %v2177
    %v2179 = vsel %vm2133, %v2084, 0.0
    %v2180 = vadd.f32 %v2178, %v2179
    %v2181 = vsel %vm2133, %v2086, 0.0
    %v2182 = vadd.f32 %v2180, %v2181
    %v2183 = vsel %vm2133, %v2088, 0.0
    %v2184 = vadd.f32 %v2182, %v2183
    %v2185 = vsel %vm2133, %v2090, 0.0
    %v2186 = vadd.f32 %v2184, %v2185
    %v2187 = vsel %vm2133, %v2092, 0.0
    %v2188 = vadd.f32 %v2186, %v2187
    %v2189 = vsel %vm2133, %v2094, 0.0
    %v2190 = vadd.f32 %v2188, %v2189
    %v2191 = vsel %vm2133, %v2096, 0.0
    %v2192 = vadd.f32 %v2190, %v2191
    %v2193 = vsel %vm2133, %v2098, 0.0
    %v2194 = vadd.f32 %v2192, %v2193
    %v2195 = vsel %vm2133, %v2100, 0.0
    %v2196 = vadd.f32 %v2194, %v2195
    %2197 = vadd.xlane.f32.xlu0 %v2196
    %v2198 = vpop.xlane.xlu0 %2197
    %v2199 = vrot.slane %v2198, 4
    %v2200 = vadd.f32 %v2198, %v2199
    %v2201 = vrot.slane %v2200, 2
    %v2202 = vadd.f32 %v2200, %v2201
    %v2203 = vrot.slane %v2202, 1
    %v2204 = vadd.f32 %v2202, %v2203
    %s2205 = vtos %v2204
    %v2206 = vrcp.pop 65536.0
    %s2207 = vtos %v2206
    %s2208 = smul.f32 %s2205, %s2207
    %s2209 = scalar_lea.smem [#allocation7], 0
    %2210 = sst [smem:[%s2209]] %s2208
    // Predicated region
    $region46: #{tpu_custom_call.1} parent=1 // pred_check
      _
    $region47: #{tpu_custom_call.1} parent=1 // pred_check_branch
      %2212 = sbr.rel (0) target = $region49
    $region48: #{tpu_custom_call.1} parent=1 // pred_region
      %s2214 = ssub.s32 16, 16
      %2215 = vsyncadd [#allocation4], %s2214
      %2218 = dma.smem_to_hbm [#allocation7], 16, %s9, [#allocation4]
    $region49: #{tpu_custom_call.1} parent=1 // pred_fallthru
      _
    // Predicated region
    $region50: #{tpu_custom_call.1} parent=1 // pred_check
      _
    $region51: #{tpu_custom_call.1} parent=1 // pred_check_branch
      %2220 = sbr.rel (0) target = $region53
    $region52: #{tpu_custom_call.1} parent=1 // pred_region
      %2221 = dma.done [#allocation4], 16
    $region53: #{tpu_custom_call.1} parent=1 // pred_fallthru
      _
    %2222 = sfence
    %2223 = vsyncpa [#allocation3], 1
    %2224 = vsyncpa [#allocation6], 1
    %2225 = vsyncpa [#allocation4], 1

</llo_original>
